<compile_context>
chip_gen: v6e
topology: v6e:2x2x1
jax: 0.10.0
libtpu: 0.0.40
codegen_flags: <defaults>
</compile_context>

<pallas_src>
import math

import jax
import jax.numpy as jnp
import numpy as np
from jax.experimental import pallas as pl
from jax.experimental.pallas import tpu as pltpu

B = 2        # batch
T = 8        # max_length (number of tree positions)
EMB = 32     # opt.embed_size
HID = 32     # opt.hidden_size (must equal EMB for weight_I shapes to line up)
FC = 48      # opt.fc_feat_size
V = 128      # opt.vocab_size

GIN = 2 * EMB + 3 * HID     # fused gate-matmul input width  (160)
GOUT = 5 * HID              # fused gate-matmul output width (160)
WORD_LANES = 2 * V          # [father-word one-hot | left-brother one-hot]
STATE_LANES = T * HID       # lane-expanded father one-hot (for state gather)
MASK_LANES = WORD_LANES + STATE_LANES   # 512


def _mdin_kernel(masks_ref,          # (T*Bp, 512)  [a_word_oh | f_word_oh | fa_state_oh_expanded]
                 fc_ref,             # (Bp, FC)     raw fc features
                 w_word_ref,         # (2V, GOUT)   embed-table folded into static gate weight
                 w_fc_ref,           # (FC, GOUT)   fc_embed folded into static gate weight
                 b_all_ref,          # (1, GOUT)    all gate biases (incl. folded bfc)
                 w_rec_ref,          # (2H, GOUT)   recurrent gate weight ([h_a_h, h_f_h])
                 wl_ref, bl_ref,     # (HID, V), (1, V) logit layer
                 out_ref,            # (T*Bp, V)    log-probs
                 g_stat_ref,         # scratch (T*Bp, GOUT)  step-invariant gate pre-activations
                 h_pack_ref,         # scratch (Bp, T*HID)   lane-packed h history
                 c_pack_ref,         # scratch (Bp, T*HID)   lane-packed c history
                 h_seq_ref):         # scratch (T*Bp, HID)   per-step outputs for the logit matmul
    Bp = fc_ref.shape[0]

    # ---- step-invariant gate contributions (off the recurrence chain) ----
    # word-embedding part: one big matmul for all T steps (embed folded in).
    g_stat_ref[...] = jnp.dot(masks_ref[:, :WORD_LANES], w_word_ref[...],
                              preferred_element_type=jnp.float32)
    # att part (fc_embed folded in) + every bias, identical for all steps.
    att_g = jnp.dot(fc_ref[...], w_fc_ref[...],
                    preferred_element_type=jnp.float32) + b_all_ref[...]

    # zero-init the lane-packed state history (chunk t of a row = node t state)
    h_pack_ref[...] = jnp.zeros_like(h_pack_ref)
    c_pack_ref[...] = jnp.zeros_like(c_pack_ref)

    w_rec = w_rec_ref[...]
    zeros_h = jnp.zeros((Bp, HID), jnp.float32)

    def fold_chunks(x):
        # (Bp, T*HID) -> (Bp, HID): sum the T lane chunks via an XLU roll tree.
        x = x + pltpu.roll(x, shift=4 * HID, axis=1)
        x = x + pltpu.roll(x, shift=2 * HID, axis=1)
        x = x + pltpu.roll(x, shift=HID, axis=1)
        return x[:, :HID]

    prev_h, prev_c = zeros_h, zeros_h

    # Fully unrolled recurrence; all indices are static Python ints.
    for i in range(T):
        r0, r1 = i * Bp, (i + 1) * Bp

        if i == 0:
            h_a_h, h_a_c = zeros_h, zeros_h
            h_f_h, h_f_c = zeros_h, zeros_h
        else:
            # Vectorized father-state gather: lane-expanded one-hot * packed
            # history slab, folded with rolls (full-width vregs, no per-chunk
            # scalar masks).  Unwritten chunks are zero => matches zero init.
            oh = masks_ref[r0:r1, WORD_LANES:]                   # (Bp, T*HID)
            h_a_h = fold_chunks(oh * h_pack_ref[...])
            h_a_c = fold_chunks(oh * c_pack_ref[...])
            if (i - 1) % 3 == 0:
                h_f_h, h_f_c = zeros_h, zeros_h
            else:
                h_f_h, h_f_c = prev_h, prev_c

        # Recurrent part of the fused gate matmul: K = 2H only.
        h_rec = jnp.concatenate([h_a_h, h_f_h], axis=1)          # (Bp, 2H)
        g = (g_stat_ref[r0:r1, :] + att_g
             + jnp.dot(h_rec, w_rec, preferred_element_type=jnp.float32))

        # Gate columns are ordered [ingate|outgate|f1|f2|cellgate]:
        # one lane-dense sigmoid over 128 lanes + one 32-lane tanh.
        sig = jax.nn.sigmoid(g[:, :4 * HID])
        cell = jnp.tanh(g[:, 4 * HID:])
        ingate = sig[:, 0:HID]
        outgate = sig[:, HID:2 * HID]
        f1 = sig[:, 2 * HID:3 * HID]
        f2 = sig[:, 3 * HID:4 * HID]

        next_c = f1 * h_a_c + f2 * h_f_c + ingate * cell
        next_h = outgate * jnp.tanh(next_c)

        # Static-slice stores: lane chunk i of the packed slabs, sublane rows
        # of the output sequence scratch (keeps vreg pressure flat).
        h_pack_ref[:, i * HID:(i + 1) * HID] = next_h
        c_pack_ref[:, i * HID:(i + 1) * HID] = next_c
        h_seq_ref[r0:r1, :] = next_h
        prev_h, prev_c = next_h, next_c

    # TODO(synk): nn.Dropout(p=0.5) is treated as identity (eval-mode forward).
    # Single batched logit matmul + log_softmax, single lane-dense output store.
    logits = jnp.dot(h_seq_ref[...], wl_ref[...],
                     preferred_element_type=jnp.float32) + bl_ref[...]
    m = jnp.max(logits, axis=-1, keepdims=True)
    lse = jnp.log(jnp.sum(jnp.exp(logits - m), axis=-1, keepdims=True)) + m
    out_ref[...] = logits - lse


def prepare_params(params):
    """One-time weight prep (outside jit): fuse the four gate matmuls, reorder
    output columns to [ingate|outgate|f1|f2|cellgate], split static/recurrent
    rows, and fold the embedding table and fc_embed into the static weights."""
    E, H = EMB, HID
    hp = jax.lax.Precision.HIGHEST

    wHt = params["wH"].T        # (2E+2H, 2H)  inputs [x_a, x_f, h_a, h_f]
    wIt = params["wI"].T        # (2E+3H, H)   inputs [x_a, x_f, h_a, h_f, att]
    wf1t = params["wf1"].T      # (E+H, H)     inputs [x_a, h_a]
    wf2t = params["wf2"].T      # (E+H, H)     inputs [x_f, h_f]

    # fused input rows:  x_a 0:E | x_f E:2E | att 2E:2E+H | h_a | h_f
    xa, xf, at_, ha, hf = 0, E, 2 * E, 2 * E + H, 2 * E + 2 * H
    # fused output cols: ingate 0:H | outgate H:2H | f1 2H:3H | f2 3H:4H | cell 4H:5H
    W = jnp.zeros((GIN, GOUT), jnp.float32)
    # ingate + outgate (weight_H)
    W = W.at[xa:xa + E, 0:2 * H].set(wHt[0:E])
    W = W.at[xf:xf + E, 0:2 * H].set(wHt[E:2 * E])
    W = W.at[ha:ha + H, 0:2 * H].set(wHt[2 * E:2 * E + H])
    W = W.at[hf:hf + H, 0:2 * H].set(wHt[2 * E + H:2 * E + 2 * H])
    # forgetgate1 (weight_f1 on [x_a, h_a])
    W = W.at[xa:xa + E, 2 * H:3 * H].set(wf1t[0:E])
    W = W.at[ha:ha + H, 2 * H:3 * H].set(wf1t[E:E + H])
    # forgetgate2 (weight_f2 on [x_f, h_f])
    W = W.at[xf:xf + E, 3 * H:4 * H].set(wf2t[0:E])
    W = W.at[hf:hf + H, 3 * H:4 * H].set(wf2t[E:E + H])
    # cellgate (weight_I on [x_a, x_f, h_a, h_f, att])
    W = W.at[xa:xa + E, 4 * H:5 * H].set(wIt[0:E])
    W = W.at[xf:xf + E, 4 * H:5 * H].set(wIt[E:2 * E])
    W = W.at[ha:ha + H, 4 * H:5 * H].set(wIt[2 * E:2 * E + H])
    W = W.at[hf:hf + H, 4 * H:5 * H].set(wIt[2 * E + H:2 * E + 2 * H])
    W = W.at[at_:at_ + H, 4 * H:5 * H].set(wIt[2 * E + 2 * H:2 * E + 3 * H])

    b_fused = jnp.concatenate(
        [params["bH"], params["bf1"], params["bf2"], params["bI"]])  # (GOUT,)

    W_static = W[:2 * E + H]        # rows [x_a, x_f, att]   (96, GOUT)
    W_rec = W[2 * E + H:]           # rows [h_a, h_f]        (64, GOUT)
    W_att = W_static[2 * E:2 * E + H]                        # (H, GOUT)

    embed = params["embed"]                                  # (V, E)
    # Fold the embedding table: one-hot word ids hit these directly.
    W_word = jnp.concatenate(
        [jnp.matmul(embed, W_static[0:E], precision=hp),
         jnp.matmul(embed, W_static[E:2 * E], precision=hp)], axis=0)  # (2V, GOUT)
    # Fold fc_embed: att = fc @ wfc^T + bfc  =>  att @ W_att = fc @ W_fc + bfc @ W_att
    wfc_t = params["wfc"].T                                  # (FC, E)
    W_fc = jnp.matmul(wfc_t, W_att, precision=hp)            # (FC, GOUT)
    b_all = (jnp.matmul(params["bfc"], W_att, precision=hp) + b_fused)[None, :]

    return {
        "w_word": W_word,
        "w_fc": W_fc,
        "b_all": b_all,
        "w_rec": W_rec,
        "wlogit_t": params["wlogit"].T,
        "blogit": params["blogit"][None, :],
    }


@jax.jit
def tree_model_mdin_forward(word_idx, father_idx, fc_feats, prep):
    """word_idx, father_idx: (B, T) int32; fc_feats: (B, FC). Returns (B, T, V)."""
    bsz = word_idx.shape[0]
    bp = ((bsz + 7) // 8) * 8                 # pad batch to the f32 sublane count
    pad = bp - bsz

    word_idx = word_idx.astype(jnp.int32)
    fa = jnp.clip(father_idx.astype(jnp.int32), 0, T - 1)          # (B, T)
    fa_word = jnp.take_along_axis(word_idx, fa, axis=1)            # (B, T)
    prev_word = jnp.concatenate(
        [jnp.zeros((bsz, 1), jnp.int32), word_idx[:, :-1]], axis=1)

    steps = jnp.arange(T)
    a_valid = steps > 0
    f_valid = (steps > 0) & (((steps - 1) % 3) != 0)
    vocab = jnp.arange(V)

    # word-level one-hots (embedding table is folded into the kernel weights)
    a_oh = (fa_word[:, :, None] == vocab) & a_valid[None, :, None]      # (B, T, V)
    f_oh = (prev_word[:, :, None] == vocab) & f_valid[None, :, None]    # (B, T, V)
    # lane-expanded father one-hot for the in-kernel state gather
    s_oh = (fa[:, :, None] == jnp.arange(T))                            # (B, T, T)
    s_oh = jnp.broadcast_to(s_oh[:, :, :, None],
                            (bsz, T, T, HID)).reshape(bsz, T, STATE_LANES)

    masks = jnp.concatenate([a_oh, f_oh, s_oh], axis=-1).astype(jnp.float32)
    masks = jnp.transpose(masks, (1, 0, 2))                             # (T, B, 512)
    masks = jnp.pad(masks, ((0, 0), (0, pad), (0, 0))).reshape(T * bp, MASK_LANES)
    fc_pad = jnp.pad(fc_feats.astype(jnp.float32), ((0, pad), (0, 0)))  # (bp, FC)

    vmem = pl.BlockSpec(memory_space=pltpu.MemorySpace.VMEM)
    out_flat = pl.pallas_call(
        _mdin_kernel,
        out_shape=jax.ShapeDtypeStruct((T * bp, V), jnp.float32),
        in_specs=[vmem] * 8,
        out_specs=vmem,
        scratch_shapes=[
            pltpu.VMEM((T * bp, GOUT), jnp.float32),     # g_stat
            pltpu.VMEM((bp, STATE_LANES), jnp.float32),  # h_pack
            pltpu.VMEM((bp, STATE_LANES), jnp.float32),  # c_pack
            pltpu.VMEM((T * bp, HID), jnp.float32),      # h_seq
        ],
    )(masks, fc_pad,
      prep["w_word"], prep["w_fc"], prep["b_all"], prep["w_rec"],
      prep["wlogit_t"], prep["blogit"])

    out = out_flat.reshape(T, bp, V)[:, :bsz]                  # drop batch padding
    return jnp.transpose(out, (1, 0, 2))                       # (B, T, V)


def reference_forward(word_idx, father_idx, fc_feats, params):
    """Pure-JAX re-implementation of TreeModelMDIN.forward (eval-mode dropout)."""
    bsz = word_idx.shape[0]
    sig = jax.nn.sigmoid
    att = fc_feats @ params["wfc"].T + params["bfc"]
    h_states = jnp.zeros((bsz, T, HID), jnp.float32)
    c_states = jnp.zeros((bsz, T, HID), jnp.float32)
    zeros_e = jnp.zeros((bsz, EMB), jnp.float32)
    zeros_h = jnp.zeros((bsz, HID), jnp.float32)
    outs = []
    for i in range(T):
        if i == 0:
            x_a, x_f = zeros_e, zeros_e
            h_a, h_f = (zeros_h, zeros_h), (zeros_h, zeros_h)
        else:
            rows = jnp.arange(bsz)
            fidx = father_idx[:, i]
            x_a = params["embed"][word_idx[rows, fidx]]
            h_a = (h_states[rows, fidx], c_states[rows, fidx])
            if (i - 1) % 3 == 0:
                x_f, h_f = zeros_e, (zeros_h, zeros_h)
            else:
                x_f = params["embed"][word_idx[:, i - 1]]
                h_f = (h_states[:, i - 1], c_states[:, i - 1])
        Hcat = jnp.concatenate([x_a, x_f, h_a[0], h_f[0]], axis=1)
        gates = Hcat @ params["wH"].T + params["bH"]
        ingate, outgate = sig(gates[:, :HID]), sig(gates[:, HID:])
        Hhat = jnp.concatenate([Hcat, att], axis=1)
        cellgate = jnp.tanh(Hhat @ params["wI"].T + params["bI"])
        f1 = sig(jnp.concatenate([x_a, h_a[0]], 1) @ params["wf1"].T + params["bf1"])
        f2 = sig(jnp.concatenate([x_f, h_f[0]], 1) @ params["wf2"].T + params["bf2"])
        nc = f1 * h_a[1] + f2 * h_f[1] + ingate * cellgate
        nh = outgate * jnp.tanh(nc)
        h_states = h_states.at[:, i].set(nh)
        c_states = c_states.at[:, i].set(nc)
        outs.append(nh)
    logits = jnp.stack(outs, axis=1) @ params["wlogit"].T + params["blogit"]
    return jax.nn.log_softmax(logits, axis=2)


if __name__ == "__main__":
    key = jax.random.PRNGKey(0)
    ks = jax.random.split(key, 20)

    def u(k, shape, s):
        return jax.random.uniform(k, shape, jnp.float32, -s, s)

    stdv = 1.0 / math.sqrt(HID)
    params = {
        "wH":     u(ks[0], (2 * HID, 2 * EMB + 2 * HID), stdv),
        "bH":     u(ks[1], (2 * HID,), stdv),
        "wI":     u(ks[2], (HID, 2 * EMB + 2 * HID + HID), stdv),
        "bI":     u(ks[3], (HID,), stdv),
        "wf1":    u(ks[4], (HID, EMB + HID), stdv),
        "bf1":    u(ks[5], (HID,), stdv),
        "wf2":    u(ks[6], (HID, EMB + HID), stdv),
        "bf2":    u(ks[7], (HID,), stdv),
        "wfc":    u(ks[8], (EMB, FC), 1.0 / math.sqrt(FC)),
        "bfc":    u(ks[9], (EMB,), 1.0 / math.sqrt(FC)),
        "embed":  0.1 * jax.random.normal(ks[10], (V, EMB), jnp.float32),
        "wlogit": u(ks[11], (V, HID), 1.0 / math.sqrt(HID)),
        "blogit": u(ks[12], (V,), 1.0 / math.sqrt(HID)),
    }

    word_idx = jax.random.randint(ks[13], (B, T), 0, V, dtype=jnp.int32)
    # valid tree: father of node i lives at an earlier position
    fa_cols = [jnp.zeros((B,), jnp.int32)]
    for i in range(1, T):
        fa_cols.append(jax.random.randint(ks[14 + (i % 5)], (B,), 0, i, dtype=jnp.int32))
    father_idx = jnp.stack(fa_cols, axis=1)
    fc_feats = jax.random.normal(ks[19], (B, FC), jnp.float32)

    prep = prepare_params(params)     # one-time: fuse + fold weights

    out = tree_model_mdin_forward(word_idx, father_idx, fc_feats, prep)
    out = jax.block_until_ready(out)
    assert out.shape == (B, T, V)

    ref = reference_forward(word_idx, father_idx, fc_feats, params)
    np.testing.assert_allclose(np.asarray(out), np.asarray(ref), rtol=1e-4, atol=1e-4)

    print("KERNEL_OK")
</pallas_src>

<mosaic_0001>
module attributes {stable_mosaic.version = 11 : i64} {
  func.func @_mdin_kernel(%arg0: memref<64x512xf32, #tpu.memory_space<vmem>>, %arg1: memref<8x48xf32, #tpu.memory_space<vmem>>, %arg2: memref<256x160xf32, #tpu.memory_space<vmem>>, %arg3: memref<48x160xf32, #tpu.memory_space<vmem>>, %arg4: memref<1x160xf32, #tpu.memory_space<vmem>>, %arg5: memref<64x160xf32, #tpu.memory_space<vmem>>, %arg6: memref<32x128xf32, #tpu.memory_space<vmem>>, %arg7: memref<1x128xf32, #tpu.memory_space<vmem>>, %arg8: memref<64x128xf32, #tpu.memory_space<vmem>>, %arg9: memref<64x160xf32, #tpu.memory_space<vmem>>, %arg10: memref<8x256xf32, #tpu.memory_space<vmem>>, %arg11: memref<8x256xf32, #tpu.memory_space<vmem>>, %arg12: memref<64x32xf32, #tpu.memory_space<vmem>>) attributes {dimension_semantics = [], scalar_prefetch = 0 : i64, scratch_operands = 4 : i64, tpu.core_type = #tpu.core_type<tc>} {
    %c0 = arith.constant 0 : index
    %c0_0 = arith.constant 0 : index
    %0 = vector.load %arg0[%c0, %c0_0] : memref<64x512xf32, #tpu.memory_space<vmem>>, vector<64x256xf32>
    %c0_1 = arith.constant 0 : index
    %c0_2 = arith.constant 0 : index
    %1 = vector.load %arg2[%c0_1, %c0_2] : memref<256x160xf32, #tpu.memory_space<vmem>>, vector<256x160xf32>
    %cst = arith.constant dense<0.000000e+00> : vector<64x160xf32>
    %2 = tpu.matmul %0, %1, %cst {dimension_numbers = #tpu.dot_dimension_numbers<[1], [0], [0], [1], [0, 0, 1, 1], [], []>} : vector<64x256xf32>, vector<256x160xf32>, vector<64x160xf32> -> vector<64x160xf32>
    %c0_3 = arith.constant 0 : index
    %c0_4 = arith.constant 0 : index
    %3 = vector.load %arg9[%c0_3, %c0_4] : memref<64x160xf32, #tpu.memory_space<vmem>>, vector<64x160xf32>
    tpu.vector_store %arg9[%c0_3, %c0_4], %2 {strides = array<i32>} : memref<64x160xf32, #tpu.memory_space<vmem>>, vector<64x160xf32>,
    %c0_5 = arith.constant 0 : index
    %c0_6 = arith.constant 0 : index
    %4 = vector.load %arg1[%c0_5, %c0_6] : memref<8x48xf32, #tpu.memory_space<vmem>>, vector<8x48xf32>
    %c0_7 = arith.constant 0 : index
    %c0_8 = arith.constant 0 : index
    %5 = vector.load %arg3[%c0_7, %c0_8] : memref<48x160xf32, #tpu.memory_space<vmem>>, vector<48x160xf32>
    %cst_9 = arith.constant dense<0.000000e+00> : vector<8x160xf32>
    %6 = tpu.matmul %4, %5, %cst_9 {dimension_numbers = #tpu.dot_dimension_numbers<[1], [0], [0], [1], [0, 0, 1, 1], [], []>} : vector<8x48xf32>, vector<48x160xf32>, vector<8x160xf32> -> vector<8x160xf32>
    %c0_10 = arith.constant 0 : index
    %c0_11 = arith.constant 0 : index
    %7 = vector.load %arg4[%c0_10, %c0_11] : memref<1x160xf32, #tpu.memory_space<vmem>>, vector<1x160xf32>
    %8 = vector.broadcast %7 : vector<1x160xf32> to vector<8x160xf32>
    %9 = arith.addf %6, %8 : vector<8x160xf32>
    %cst_12 = arith.constant 0.000000e+00 : f32
    %10 = vector.broadcast %cst_12 : f32 to vector<8x256xf32>
    %c0_13 = arith.constant 0 : index
    %c0_14 = arith.constant 0 : index
    %11 = vector.load %arg10[%c0_13, %c0_14] : memref<8x256xf32, #tpu.memory_space<vmem>>, vector<8x256xf32>
    tpu.vector_store %arg10[%c0_13, %c0_14], %10 {strides = array<i32>} : memref<8x256xf32, #tpu.memory_space<vmem>>, vector<8x256xf32>,
    %cst_15 = arith.constant 0.000000e+00 : f32
    %12 = vector.broadcast %cst_15 : f32 to vector<8x256xf32>
    %c0_16 = arith.constant 0 : index
    %c0_17 = arith.constant 0 : index
    %13 = vector.load %arg11[%c0_16, %c0_17] : memref<8x256xf32, #tpu.memory_space<vmem>>, vector<8x256xf32>
    tpu.vector_store %arg11[%c0_16, %c0_17], %12 {strides = array<i32>} : memref<8x256xf32, #tpu.memory_space<vmem>>, vector<8x256xf32>,
    %c0_18 = arith.constant 0 : index
    %c0_19 = arith.constant 0 : index
    %14 = vector.load %arg5[%c0_18, %c0_19] : memref<64x160xf32, #tpu.memory_space<vmem>>, vector<64x160xf32>
    %cst_20 = arith.constant 0.000000e+00 : f32
    %15 = vector.broadcast %cst_20 : f32 to vector<8x32xf32>
    %16 = tpu.concatenate %15, %15 in 1 : vector<8x32xf32>, vector<8x32xf32> -> vector<8x64xf32>
    %c0_21 = arith.constant 0 : index
    %c0_22 = arith.constant 0 : index
    %17 = vector.load %arg9[%c0_21, %c0_22] : memref<64x160xf32, #tpu.memory_space<vmem>>, vector<8x160xf32>
    %18 = arith.addf %17, %9 : vector<8x160xf32>
    %cst_23 = arith.constant dense<0.000000e+00> : vector<8x160xf32>
    %19 = tpu.matmul %16, %14, %cst_23 {dimension_numbers = #tpu.dot_dimension_numbers<[1], [0], [0], [1], [0, 0, 1, 1], [], []>} : vector<8x64xf32>, vector<64x160xf32>, vector<8x160xf32> -> vector<8x160xf32>
    %20 = arith.addf %18, %19 : vector<8x160xf32>
    %21 = vector.extract_strided_slice %20 {offsets = [0, 0], sizes = [8, 128], strides = [1, 1]} : vector<8x160xf32> to vector<8x128xf32>
    %22 = arith.negf %21 : vector<8x128xf32>
    %23 = math.exp %22 : vector<8x128xf32>
    %cst_24 = arith.constant 1.000000e+00 : f32
    %24 = vector.broadcast %cst_24 : f32 to vector<8x128xf32>
    %25 = arith.addf %24, %23 : vector<8x128xf32>
    %26 = arith.divf %24, %25 : vector<8x128xf32>
    %27 = vector.extract_strided_slice %20 {offsets = [0, 128], sizes = [8, 32], strides = [1, 1]} : vector<8x160xf32> to vector<8x32xf32>
    %28 = math.tanh %27 : vector<8x32xf32>
    %29 = vector.extract_strided_slice %26 {offsets = [0, 0], sizes = [8, 32], strides = [1, 1]} : vector<8x128xf32> to vector<8x32xf32>
    %30 = vector.extract_strided_slice %26 {offsets = [0, 32], sizes = [8, 32], strides = [1, 1]} : vector<8x128xf32> to vector<8x32xf32>
    %31 = vector.extract_strided_slice %26 {offsets = [0, 64], sizes = [8, 32], strides = [1, 1]} : vector<8x128xf32> to vector<8x32xf32>
    %32 = vector.extract_strided_slice %26 {offsets = [0, 96], sizes = [8, 32], strides = [1, 1]} : vector<8x128xf32> to vector<8x32xf32>
    %33 = arith.mulf %31, %15 : vector<8x32xf32>
    %34 = arith.mulf %32, %15 : vector<8x32xf32>
    %35 = arith.addf %33, %34 : vector<8x32xf32>
    %36 = arith.mulf %29, %28 : vector<8x32xf32>
    %37 = arith.addf %35, %36 : vector<8x32xf32>
    %38 = math.tanh %37 : vector<8x32xf32>
    %39 = arith.mulf %30, %38 : vector<8x32xf32>
    %c0_25 = arith.constant 0 : index
    %c0_26 = arith.constant 0 : index
    %40 = vector.load %arg10[%c0_25, %c0_26] : memref<8x256xf32, #tpu.memory_space<vmem>>, vector<8x32xf32>
    tpu.vector_store %arg10[%c0_25, %c0_26], %39 {strides = array<i32>} : memref<8x256xf32, #tpu.memory_space<vmem>>, vector<8x32xf32>,
    %c0_27 = arith.constant 0 : index
    %c0_28 = arith.constant 0 : index
    %41 = vector.load %arg11[%c0_27, %c0_28] : memref<8x256xf32, #tpu.memory_space<vmem>>, vector<8x32xf32>
    tpu.vector_store %arg11[%c0_27, %c0_28], %37 {strides = array<i32>} : memref<8x256xf32, #tpu.memory_space<vmem>>, vector<8x32xf32>,
    %c0_29 = arith.constant 0 : index
    %c0_30 = arith.constant 0 : index
    %42 = vector.load %arg12[%c0_29, %c0_30] : memref<64x32xf32, #tpu.memory_space<vmem>>, vector<8x32xf32>
    tpu.vector_store %arg12[%c0_29, %c0_30], %39 {strides = array<i32>} : memref<64x32xf32, #tpu.memory_space<vmem>>, vector<8x32xf32>,
    %c8 = arith.constant 8 : index
    %c256 = arith.constant 256 : index
    %43 = vector.load %arg0[%c8, %c256] : memref<64x512xf32, #tpu.memory_space<vmem>>, vector<8x256xf32>
    %c0_31 = arith.constant 0 : index
    %c0_32 = arith.constant 0 : index
    %44 = vector.load %arg10[%c0_31, %c0_32] : memref<8x256xf32, #tpu.memory_space<vmem>>, vector<8x256xf32>
    %45 = arith.mulf %43, %44 : vector<8x256xf32>
    %c128_i32 = arith.constant 128 : i32
    %46 = tpu.dynamic_rotate %45 by %c128_i32 dim 1 : vector<8x256xf32>, i32 -> vector<8x256xf32>
    %47 = arith.addf %45, %46 : vector<8x256xf32>
    %c64_i32 = arith.constant 64 : i32
    %48 = tpu.dynamic_rotate %47 by %c64_i32 dim 1 : vector<8x256xf32>, i32 -> vector<8x256xf32>
    %49 = arith.addf %47, %48 : vector<8x256xf32>
    %c32_i32 = arith.constant 32 : i32
    %50 = tpu.dynamic_rotate %49 by %c32_i32 dim 1 : vector<8x256xf32>, i32 -> vector<8x256xf32>
    %51 = arith.addf %49, %50 : vector<8x256xf32>
    %52 = vector.extract_strided_slice %51 {offsets = [0, 0], sizes = [8, 32], strides = [1, 1]} : vector<8x256xf32> to vector<8x32xf32>
    %c0_33 = arith.constant 0 : index
    %c0_34 = arith.constant 0 : index
    %53 = vector.load %arg11[%c0_33, %c0_34] : memref<8x256xf32, #tpu.memory_space<vmem>>, vector<8x256xf32>
    %54 = arith.mulf %43, %53 : vector<8x256xf32>
    %c128_i32_35 = arith.constant 128 : i32
    %55 = tpu.dynamic_rotate %54 by %c128_i32_35 dim 1 : vector<8x256xf32>, i32 -> vector<8x256xf32>
    %56 = arith.addf %54, %55 : vector<8x256xf32>
    %c64_i32_36 = arith.constant 64 : i32
    %57 = tpu.dynamic_rotate %56 by %c64_i32_36 dim 1 : vector<8x256xf32>, i32 -> vector<8x256xf32>
    %58 = arith.addf %56, %57 : vector<8x256xf32>
    %c32_i32_37 = arith.constant 32 : i32
    %59 = tpu.dynamic_rotate %58 by %c32_i32_37 dim 1 : vector<8x256xf32>, i32 -> vector<8x256xf32>
    %60 = arith.addf %58, %59 : vector<8x256xf32>
    %61 = vector.extract_strided_slice %60 {offsets = [0, 0], sizes = [8, 32], strides = [1, 1]} : vector<8x256xf32> to vector<8x32xf32>
    %62 = tpu.concatenate %52, %15 in 1 : vector<8x32xf32>, vector<8x32xf32> -> vector<8x64xf32>
    %c8_38 = arith.constant 8 : index
    %c0_39 = arith.constant 0 : index
    %63 = vector.load %arg9[%c8_38, %c0_39] : memref<64x160xf32, #tpu.memory_space<vmem>>, vector<8x160xf32>
    %64 = arith.addf %63, %9 : vector<8x160xf32>
    %cst_40 = arith.constant dense<0.000000e+00> : vector<8x160xf32>
    %65 = tpu.matmul %62, %14, %cst_40 {dimension_numbers = #tpu.dot_dimension_numbers<[1], [0], [0], [1], [0, 0, 1, 1], [], []>} : vector<8x64xf32>, vector<64x160xf32>, vector<8x160xf32> -> vector<8x160xf32>
    %66 = arith.addf %64, %65 : vector<8x160xf32>
    %67 = vector.extract_strided_slice %66 {offsets = [0, 0], sizes = [8, 128], strides = [1, 1]} : vector<8x160xf32> to vector<8x128xf32>
    %68 = arith.negf %67 : vector<8x128xf32>
    %69 = math.exp %68 : vector<8x128xf32>
    %cst_41 = arith.constant 1.000000e+00 : f32
    %70 = vector.broadcast %cst_41 : f32 to vector<8x128xf32>
    %71 = arith.addf %70, %69 : vector<8x128xf32>
    %72 = arith.divf %70, %71 : vector<8x128xf32>
    %73 = vector.extract_strided_slice %66 {offsets = [0, 128], sizes = [8, 32], strides = [1, 1]} : vector<8x160xf32> to vector<8x32xf32>
    %74 = math.tanh %73 : vector<8x32xf32>
    %75 = vector.extract_strided_slice %72 {offsets = [0, 0], sizes = [8, 32], strides = [1, 1]} : vector<8x128xf32> to vector<8x32xf32>
    %76 = vector.extract_strided_slice %72 {offsets = [0, 32], sizes = [8, 32], strides = [1, 1]} : vector<8x128xf32> to vector<8x32xf32>
    %77 = vector.extract_strided_slice %72 {offsets = [0, 64], sizes = [8, 32], strides = [1, 1]} : vector<8x128xf32> to vector<8x32xf32>
    %78 = vector.extract_strided_slice %72 {offsets = [0, 96], sizes = [8, 32], strides = [1, 1]} : vector<8x128xf32> to vector<8x32xf32>
    %79 = arith.mulf %77, %61 : vector<8x32xf32>
    %80 = arith.mulf %78, %15 : vector<8x32xf32>
    %81 = arith.addf %79, %80 : vector<8x32xf32>
    %82 = arith.mulf %75, %74 : vector<8x32xf32>
    %83 = arith.addf %81, %82 : vector<8x32xf32>
    %84 = math.tanh %83 : vector<8x32xf32>
    %85 = arith.mulf %76, %84 : vector<8x32xf32>
    %c0_42 = arith.constant 0 : index
    %c32 = arith.constant 32 : index
    %86 = vector.load %arg10[%c0_42, %c32] : memref<8x256xf32, #tpu.memory_space<vmem>>, vector<8x32xf32>
    tpu.vector_store %arg10[%c0_42, %c32], %85 {strides = array<i32>} : memref<8x256xf32, #tpu.memory_space<vmem>>, vector<8x32xf32>,
    %c0_43 = arith.constant 0 : index
    %c32_44 = arith.constant 32 : index
    %87 = vector.load %arg11[%c0_43, %c32_44] : memref<8x256xf32, #tpu.memory_space<vmem>>, vector<8x32xf32>
    tpu.vector_store %arg11[%c0_43, %c32_44], %83 {strides = array<i32>} : memref<8x256xf32, #tpu.memory_space<vmem>>, vector<8x32xf32>,
    %c8_45 = arith.constant 8 : index
    %c0_46 = arith.constant 0 : index
    %88 = vector.load %arg12[%c8_45, %c0_46] : memref<64x32xf32, #tpu.memory_space<vmem>>, vector<8x32xf32>
    tpu.vector_store %arg12[%c8_45, %c0_46], %85 {strides = array<i32>} : memref<64x32xf32, #tpu.memory_space<vmem>>, vector<8x32xf32>,
    %c16 = arith.constant 16 : index
    %c256_47 = arith.constant 256 : index
    %89 = vector.load %arg0[%c16, %c256_47] : memref<64x512xf32, #tpu.memory_space<vmem>>, vector<8x256xf32>
    %c0_48 = arith.constant 0 : index
    %c0_49 = arith.constant 0 : index
    %90 = vector.load %arg10[%c0_48, %c0_49] : memref<8x256xf32, #tpu.memory_space<vmem>>, vector<8x256xf32>
    %91 = arith.mulf %89, %90 : vector<8x256xf32>
    %c128_i32_50 = arith.constant 128 : i32
    %92 = tpu.dynamic_rotate %91 by %c128_i32_50 dim 1 : vector<8x256xf32>, i32 -> vector<8x256xf32>
    %93 = arith.addf %91, %92 : vector<8x256xf32>
    %c64_i32_51 = arith.constant 64 : i32
    %94 = tpu.dynamic_rotate %93 by %c64_i32_51 dim 1 : vector<8x256xf32>, i32 -> vector<8x256xf32>
    %95 = arith.addf %93, %94 : vector<8x256xf32>
    %c32_i32_52 = arith.constant 32 : i32
    %96 = tpu.dynamic_rotate %95 by %c32_i32_52 dim 1 : vector<8x256xf32>, i32 -> vector<8x256xf32>
    %97 = arith.addf %95, %96 : vector<8x256xf32>
    %98 = vector.extract_strided_slice %97 {offsets = [0, 0], sizes = [8, 32], strides = [1, 1]} : vector<8x256xf32> to vector<8x32xf32>
    %c0_53 = arith.constant 0 : index
    %c0_54 = arith.constant 0 : index
    %99 = vector.load %arg11[%c0_53, %c0_54] : memref<8x256xf32, #tpu.memory_space<vmem>>, vector<8x256xf32>
    %100 = arith.mulf %89, %99 : vector<8x256xf32>
    %c128_i32_55 = arith.constant 128 : i32
    %101 = tpu.dynamic_rotate %100 by %c128_i32_55 dim 1 : vector<8x256xf32>, i32 -> vector<8x256xf32>
    %102 = arith.addf %100, %101 : vector<8x256xf32>
    %c64_i32_56 = arith.constant 64 : i32
    %103 = tpu.dynamic_rotate %102 by %c64_i32_56 dim 1 : vector<8x256xf32>, i32 -> vector<8x256xf32>
    %104 = arith.addf %102, %103 : vector<8x256xf32>
    %c32_i32_57 = arith.constant 32 : i32
    %105 = tpu.dynamic_rotate %104 by %c32_i32_57 dim 1 : vector<8x256xf32>, i32 -> vector<8x256xf32>
    %106 = arith.addf %104, %105 : vector<8x256xf32>
    %107 = vector.extract_strided_slice %106 {offsets = [0, 0], sizes = [8, 32], strides = [1, 1]} : vector<8x256xf32> to vector<8x32xf32>
    %108 = tpu.concatenate %98, %85 in 1 : vector<8x32xf32>, vector<8x32xf32> -> vector<8x64xf32>
    %c16_58 = arith.constant 16 : index
    %c0_59 = arith.constant 0 : index
    %109 = vector.load %arg9[%c16_58, %c0_59] : memref<64x160xf32, #tpu.memory_space<vmem>>, vector<8x160xf32>
    %110 = arith.addf %109, %9 : vector<8x160xf32>
    %cst_60 = arith.constant dense<0.000000e+00> : vector<8x160xf32>
    %111 = tpu.matmul %108, %14, %cst_60 {dimension_numbers = #tpu.dot_dimension_numbers<[1], [0], [0], [1], [0, 0, 1, 1], [], []>} : vector<8x64xf32>, vector<64x160xf32>, vector<8x160xf32> -> vector<8x160xf32>
    %112 = arith.addf %110, %111 : vector<8x160xf32>
    %113 = vector.extract_strided_slice %112 {offsets = [0, 0], sizes = [8, 128], strides = [1, 1]} : vector<8x160xf32> to vector<8x128xf32>
    %114 = arith.negf %113 : vector<8x128xf32>
    %115 = math.exp %114 : vector<8x128xf32>
    %cst_61 = arith.constant 1.000000e+00 : f32
    %116 = vector.broadcast %cst_61 : f32 to vector<8x128xf32>
    %117 = arith.addf %116, %115 : vector<8x128xf32>
    %118 = arith.divf %116, %117 : vector<8x128xf32>
    %119 = vector.extract_strided_slice %112 {offsets = [0, 128], sizes = [8, 32], strides = [1, 1]} : vector<8x160xf32> to vector<8x32xf32>
    %120 = math.tanh %119 : vector<8x32xf32>
    %121 = vector.extract_strided_slice %118 {offsets = [0, 0], sizes = [8, 32], strides = [1, 1]} : vector<8x128xf32> to vector<8x32xf32>
    %122 = vector.extract_strided_slice %118 {offsets = [0, 32], sizes = [8, 32], strides = [1, 1]} : vector<8x128xf32> to vector<8x32xf32>
    %123 = vector.extract_strided_slice %118 {offsets = [0, 64], sizes = [8, 32], strides = [1, 1]} : vector<8x128xf32> to vector<8x32xf32>
    %124 = vector.extract_strided_slice %118 {offsets = [0, 96], sizes = [8, 32], strides = [1, 1]} : vector<8x128xf32> to vector<8x32xf32>
    %125 = arith.mulf %123, %107 : vector<8x32xf32>
    %126 = arith.mulf %124, %83 : vector<8x32xf32>
    %127 = arith.addf %125, %126 : vector<8x32xf32>
    %128 = arith.mulf %121, %120 : vector<8x32xf32>
    %129 = arith.addf %127, %128 : vector<8x32xf32>
    %130 = math.tanh %129 : vector<8x32xf32>
    %131 = arith.mulf %122, %130 : vector<8x32xf32>
    %c0_62 = arith.constant 0 : index
    %c64 = arith.constant 64 : index
    %132 = vector.load %arg10[%c0_62, %c64] : memref<8x256xf32, #tpu.memory_space<vmem>>, vector<8x32xf32>
    tpu.vector_store %arg10[%c0_62, %c64], %131 {strides = array<i32>} : memref<8x256xf32, #tpu.memory_space<vmem>>, vector<8x32xf32>,
    %c0_63 = arith.constant 0 : index
    %c64_64 = arith.constant 64 : index
    %133 = vector.load %arg11[%c0_63, %c64_64] : memref<8x256xf32, #tpu.memory_space<vmem>>, vector<8x32xf32>
    tpu.vector_store %arg11[%c0_63, %c64_64], %129 {strides = array<i32>} : memref<8x256xf32, #tpu.memory_space<vmem>>, vector<8x32xf32>,
    %c16_65 = arith.constant 16 : index
    %c0_66 = arith.constant 0 : index
    %134 = vector.load %arg12[%c16_65, %c0_66] : memref<64x32xf32, #tpu.memory_space<vmem>>, vector<8x32xf32>
    tpu.vector_store %arg12[%c16_65, %c0_66], %131 {strides = array<i32>} : memref<64x32xf32, #tpu.memory_space<vmem>>, vector<8x32xf32>,
    %c24 = arith.constant 24 : index
    %c256_67 = arith.constant 256 : index
    %135 = vector.load %arg0[%c24, %c256_67] : memref<64x512xf32, #tpu.memory_space<vmem>>, vector<8x256xf32>
    %c0_68 = arith.constant 0 : index
    %c0_69 = arith.constant 0 : index
    %136 = vector.load %arg10[%c0_68, %c0_69] : memref<8x256xf32, #tpu.memory_space<vmem>>, vector<8x256xf32>
    %137 = arith.mulf %135, %136 : vector<8x256xf32>
    %c128_i32_70 = arith.constant 128 : i32
    %138 = tpu.dynamic_rotate %137 by %c128_i32_70 dim 1 : vector<8x256xf32>, i32 -> vector<8x256xf32>
    %139 = arith.addf %137, %138 : vector<8x256xf32>
    %c64_i32_71 = arith.constant 64 : i32
    %140 = tpu.dynamic_rotate %139 by %c64_i32_71 dim 1 : vector<8x256xf32>, i32 -> vector<8x256xf32>
    %141 = arith.addf %139, %140 : vector<8x256xf32>
    %c32_i32_72 = arith.constant 32 : i32
    %142 = tpu.dynamic_rotate %141 by %c32_i32_72 dim 1 : vector<8x256xf32>, i32 -> vector<8x256xf32>
    %143 = arith.addf %141, %142 : vector<8x256xf32>
    %144 = vector.extract_strided_slice %143 {offsets = [0, 0], sizes = [8, 32], strides = [1, 1]} : vector<8x256xf32> to vector<8x32xf32>
    %c0_73 = arith.constant 0 : index
    %c0_74 = arith.constant 0 : index
    %145 = vector.load %arg11[%c0_73, %c0_74] : memref<8x256xf32, #tpu.memory_space<vmem>>, vector<8x256xf32>
    %146 = arith.mulf %135, %145 : vector<8x256xf32>
    %c128_i32_75 = arith.constant 128 : i32
    %147 = tpu.dynamic_rotate %146 by %c128_i32_75 dim 1 : vector<8x256xf32>, i32 -> vector<8x256xf32>
    %148 = arith.addf %146, %147 : vector<8x256xf32>
    %c64_i32_76 = arith.constant 64 : i32
    %149 = tpu.dynamic_rotate %148 by %c64_i32_76 dim 1 : vector<8x256xf32>, i32 -> vector<8x256xf32>
    %150 = arith.addf %148, %149 : vector<8x256xf32>
    %c32_i32_77 = arith.constant 32 : i32
    %151 = tpu.dynamic_rotate %150 by %c32_i32_77 dim 1 : vector<8x256xf32>, i32 -> vector<8x256xf32>
    %152 = arith.addf %150, %151 : vector<8x256xf32>
    %153 = vector.extract_strided_slice %152 {offsets = [0, 0], sizes = [8, 32], strides = [1, 1]} : vector<8x256xf32> to vector<8x32xf32>
    %154 = tpu.concatenate %144, %131 in 1 : vector<8x32xf32>, vector<8x32xf32> -> vector<8x64xf32>
    %c24_78 = arith.constant 24 : index
    %c0_79 = arith.constant 0 : index
    %155 = vector.load %arg9[%c24_78, %c0_79] : memref<64x160xf32, #tpu.memory_space<vmem>>, vector<8x160xf32>
    %156 = arith.addf %155, %9 : vector<8x160xf32>
    %cst_80 = arith.constant dense<0.000000e+00> : vector<8x160xf32>
    %157 = tpu.matmul %154, %14, %cst_80 {dimension_numbers = #tpu.dot_dimension_numbers<[1], [0], [0], [1], [0, 0, 1, 1], [], []>} : vector<8x64xf32>, vector<64x160xf32>, vector<8x160xf32> -> vector<8x160xf32>
    %158 = arith.addf %156, %157 : vector<8x160xf32>
    %159 = vector.extract_strided_slice %158 {offsets = [0, 0], sizes = [8, 128], strides = [1, 1]} : vector<8x160xf32> to vector<8x128xf32>
    %160 = arith.negf %159 : vector<8x128xf32>
    %161 = math.exp %160 : vector<8x128xf32>
    %cst_81 = arith.constant 1.000000e+00 : f32
    %162 = vector.broadcast %cst_81 : f32 to vector<8x128xf32>
    %163 = arith.addf %162, %161 : vector<8x128xf32>
    %164 = arith.divf %162, %163 : vector<8x128xf32>
    %165 = vector.extract_strided_slice %158 {offsets = [0, 128], sizes = [8, 32], strides = [1, 1]} : vector<8x160xf32> to vector<8x32xf32>
    %166 = math.tanh %165 : vector<8x32xf32>
    %167 = vector.extract_strided_slice %164 {offsets = [0, 0], sizes = [8, 32], strides = [1, 1]} : vector<8x128xf32> to vector<8x32xf32>
    %168 = vector.extract_strided_slice %164 {offsets = [0, 32], sizes = [8, 32], strides = [1, 1]} : vector<8x128xf32> to vector<8x32xf32>
    %169 = vector.extract_strided_slice %164 {offsets = [0, 64], sizes = [8, 32], strides = [1, 1]} : vector<8x128xf32> to vector<8x32xf32>
    %170 = vector.extract_strided_slice %164 {offsets = [0, 96], sizes = [8, 32], strides = [1, 1]} : vector<8x128xf32> to vector<8x32xf32>
    %171 = arith.mulf %169, %153 : vector<8x32xf32>
    %172 = arith.mulf %170, %129 : vector<8x32xf32>
    %173 = arith.addf %171, %172 : vector<8x32xf32>
    %174 = arith.mulf %167, %166 : vector<8x32xf32>
    %175 = arith.addf %173, %174 : vector<8x32xf32>
    %176 = math.tanh %175 : vector<8x32xf32>
    %177 = arith.mulf %168, %176 : vector<8x32xf32>
    %c0_82 = arith.constant 0 : index
    %c96 = arith.constant 96 : index
    %178 = vector.load %arg10[%c0_82, %c96] : memref<8x256xf32, #tpu.memory_space<vmem>>, vector<8x32xf32>
    tpu.vector_store %arg10[%c0_82, %c96], %177 {strides = array<i32>} : memref<8x256xf32, #tpu.memory_space<vmem>>, vector<8x32xf32>,
    %c0_83 = arith.constant 0 : index
    %c96_84 = arith.constant 96 : index
    %179 = vector.load %arg11[%c0_83, %c96_84] : memref<8x256xf32, #tpu.memory_space<vmem>>, vector<8x32xf32>
    tpu.vector_store %arg11[%c0_83, %c96_84], %175 {strides = array<i32>} : memref<8x256xf32, #tpu.memory_space<vmem>>, vector<8x32xf32>,
    %c24_85 = arith.constant 24 : index
    %c0_86 = arith.constant 0 : index
    %180 = vector.load %arg12[%c24_85, %c0_86] : memref<64x32xf32, #tpu.memory_space<vmem>>, vector<8x32xf32>
    tpu.vector_store %arg12[%c24_85, %c0_86], %177 {strides = array<i32>} : memref<64x32xf32, #tpu.memory_space<vmem>>, vector<8x32xf32>,
    %c32_87 = arith.constant 32 : index
    %c256_88 = arith.constant 256 : index
    %181 = vector.load %arg0[%c32_87, %c256_88] : memref<64x512xf32, #tpu.memory_space<vmem>>, vector<8x256xf32>
    %c0_89 = arith.constant 0 : index
    %c0_90 = arith.constant 0 : index
    %182 = vector.load %arg10[%c0_89, %c0_90] : memref<8x256xf32, #tpu.memory_space<vmem>>, vector<8x256xf32>
    %183 = arith.mulf %181, %182 : vector<8x256xf32>
    %c128_i32_91 = arith.constant 128 : i32
    %184 = tpu.dynamic_rotate %183 by %c128_i32_91 dim 1 : vector<8x256xf32>, i32 -> vector<8x256xf32>
    %185 = arith.addf %183, %184 : vector<8x256xf32>
    %c64_i32_92 = arith.constant 64 : i32
    %186 = tpu.dynamic_rotate %185 by %c64_i32_92 dim 1 : vector<8x256xf32>, i32 -> vector<8x256xf32>
    %187 = arith.addf %185, %186 : vector<8x256xf32>
    %c32_i32_93 = arith.constant 32 : i32
    %188 = tpu.dynamic_rotate %187 by %c32_i32_93 dim 1 : vector<8x256xf32>, i32 -> vector<8x256xf32>
    %189 = arith.addf %187, %188 : vector<8x256xf32>
    %190 = vector.extract_strided_slice %189 {offsets = [0, 0], sizes = [8, 32], strides = [1, 1]} : vector<8x256xf32> to vector<8x32xf32>
    %c0_94 = arith.constant 0 : index
    %c0_95 = arith.constant 0 : index
    %191 = vector.load %arg11[%c0_94, %c0_95] : memref<8x256xf32, #tpu.memory_space<vmem>>, vector<8x256xf32>
    %192 = arith.mulf %181, %191 : vector<8x256xf32>
    %c128_i32_96 = arith.constant 128 : i32
    %193 = tpu.dynamic_rotate %192 by %c128_i32_96 dim 1 : vector<8x256xf32>, i32 -> vector<8x256xf32>
    %194 = arith.addf %192, %193 : vector<8x256xf32>
    %c64_i32_97 = arith.constant 64 : i32
    %195 = tpu.dynamic_rotate %194 by %c64_i32_97 dim 1 : vector<8x256xf32>, i32 -> vector<8x256xf32>
    %196 = arith.addf %194, %195 : vector<8x256xf32>
    %c32_i32_98 = arith.constant 32 : i32
    %197 = tpu.dynamic_rotate %196 by %c32_i32_98 dim 1 : vector<8x256xf32>, i32 -> vector<8x256xf32>
    %198 = arith.addf %196, %197 : vector<8x256xf32>
    %199 = vector.extract_strided_slice %198 {offsets = [0, 0], sizes = [8, 32], strides = [1, 1]} : vector<8x256xf32> to vector<8x32xf32>
    %200 = tpu.concatenate %190, %15 in 1 : vector<8x32xf32>, vector<8x32xf32> -> vector<8x64xf32>
    %c32_99 = arith.constant 32 : index
    %c0_100 = arith.constant 0 : index
    %201 = vector.load %arg9[%c32_99, %c0_100] : memref<64x160xf32, #tpu.memory_space<vmem>>, vector<8x160xf32>
    %202 = arith.addf %201, %9 : vector<8x160xf32>
    %cst_101 = arith.constant dense<0.000000e+00> : vector<8x160xf32>
    %203 = tpu.matmul %200, %14, %cst_101 {dimension_numbers = #tpu.dot_dimension_numbers<[1], [0], [0], [1], [0, 0, 1, 1], [], []>} : vector<8x64xf32>, vector<64x160xf32>, vector<8x160xf32> -> vector<8x160xf32>
    %204 = arith.addf %202, %203 : vector<8x160xf32>
    %205 = vector.extract_strided_slice %204 {offsets = [0, 0], sizes = [8, 128], strides = [1, 1]} : vector<8x160xf32> to vector<8x128xf32>
    %206 = arith.negf %205 : vector<8x128xf32>
    %207 = math.exp %206 : vector<8x128xf32>
    %cst_102 = arith.constant 1.000000e+00 : f32
    %208 = vector.broadcast %cst_102 : f32 to vector<8x128xf32>
    %209 = arith.addf %208, %207 : vector<8x128xf32>
    %210 = arith.divf %208, %209 : vector<8x128xf32>
    %211 = vector.extract_strided_slice %204 {offsets = [0, 128], sizes = [8, 32], strides = [1, 1]} : vector<8x160xf32> to vector<8x32xf32>
    %212 = math.tanh %211 : vector<8x32xf32>
    %213 = vector.extract_strided_slice %210 {offsets = [0, 0], sizes = [8, 32], strides = [1, 1]} : vector<8x128xf32> to vector<8x32xf32>
    %214 = vector.extract_strided_slice %210 {offsets = [0, 32], sizes = [8, 32], strides = [1, 1]} : vector<8x128xf32> to vector<8x32xf32>
    %215 = vector.extract_strided_slice %210 {offsets = [0, 64], sizes = [8, 32], strides = [1, 1]} : vector<8x128xf32> to vector<8x32xf32>
    %216 = vector.extract_strided_slice %210 {offsets = [0, 96], sizes = [8, 32], strides = [1, 1]} : vector<8x128xf32> to vector<8x32xf32>
    %217 = arith.mulf %215, %199 : vector<8x32xf32>
    %218 = arith.mulf %216, %15 : vector<8x32xf32>
    %219 = arith.addf %217, %218 : vector<8x32xf32>
    %220 = arith.mulf %213, %212 : vector<8x32xf32>
    %221 = arith.addf %219, %220 : vector<8x32xf32>
    %222 = math.tanh %221 : vector<8x32xf32>
    %223 = arith.mulf %214, %222 : vector<8x32xf32>
    %c0_103 = arith.constant 0 : index
    %c128 = arith.constant 128 : index
    %224 = vector.load %arg10[%c0_103, %c128] : memref<8x256xf32, #tpu.memory_space<vmem>>, vector<8x32xf32>
    tpu.vector_store %arg10[%c0_103, %c128], %223 {strides = array<i32>} : memref<8x256xf32, #tpu.memory_space<vmem>>, vector<8x32xf32>,
    %c0_104 = arith.constant 0 : index
    %c128_105 = arith.constant 128 : index
    %225 = vector.load %arg11[%c0_104, %c128_105] : memref<8x256xf32, #tpu.memory_space<vmem>>, vector<8x32xf32>
    tpu.vector_store %arg11[%c0_104, %c128_105], %221 {strides = array<i32>} : memref<8x256xf32, #tpu.memory_space<vmem>>, vector<8x32xf32>,
    %c32_106 = arith.constant 32 : index
    %c0_107 = arith.constant 0 : index
    %226 = vector.load %arg12[%c32_106, %c0_107] : memref<64x32xf32, #tpu.memory_space<vmem>>, vector<8x32xf32>
    tpu.vector_store %arg12[%c32_106, %c0_107], %223 {strides = array<i32>} : memref<64x32xf32, #tpu.memory_space<vmem>>, vector<8x32xf32>,
    %c40 = arith.constant 40 : index
    %c256_108 = arith.constant 256 : index
    %227 = vector.load %arg0[%c40, %c256_108] : memref<64x512xf32, #tpu.memory_space<vmem>>, vector<8x256xf32>
    %c0_109 = arith.constant 0 : index
    %c0_110 = arith.constant 0 : index
    %228 = vector.load %arg10[%c0_109, %c0_110] : memref<8x256xf32, #tpu.memory_space<vmem>>, vector<8x256xf32>
    %229 = arith.mulf %227, %228 : vector<8x256xf32>
    %c128_i32_111 = arith.constant 128 : i32
    %230 = tpu.dynamic_rotate %229 by %c128_i32_111 dim 1 : vector<8x256xf32>, i32 -> vector<8x256xf32>
    %231 = arith.addf %229, %230 : vector<8x256xf32>
    %c64_i32_112 = arith.constant 64 : i32
    %232 = tpu.dynamic_rotate %231 by %c64_i32_112 dim 1 : vector<8x256xf32>, i32 -> vector<8x256xf32>
    %233 = arith.addf %231, %232 : vector<8x256xf32>
    %c32_i32_113 = arith.constant 32 : i32
    %234 = tpu.dynamic_rotate %233 by %c32_i32_113 dim 1 : vector<8x256xf32>, i32 -> vector<8x256xf32>
    %235 = arith.addf %233, %234 : vector<8x256xf32>
    %236 = vector.extract_strided_slice %235 {offsets = [0, 0], sizes = [8, 32], strides = [1, 1]} : vector<8x256xf32> to vector<8x32xf32>
    %c0_114 = arith.constant 0 : index
    %c0_115 = arith.constant 0 : index
    %237 = vector.load %arg11[%c0_114, %c0_115] : memref<8x256xf32, #tpu.memory_space<vmem>>, vector<8x256xf32>
    %238 = arith.mulf %227, %237 : vector<8x256xf32>
    %c128_i32_116 = arith.constant 128 : i32
    %239 = tpu.dynamic_rotate %238 by %c128_i32_116 dim 1 : vector<8x256xf32>, i32 -> vector<8x256xf32>
    %240 = arith.addf %238, %239 : vector<8x256xf32>
    %c64_i32_117 = arith.constant 64 : i32
    %241 = tpu.dynamic_rotate %240 by %c64_i32_117 dim 1 : vector<8x256xf32>, i32 -> vector<8x256xf32>
    %242 = arith.addf %240, %241 : vector<8x256xf32>
    %c32_i32_118 = arith.constant 32 : i32
    %243 = tpu.dynamic_rotate %242 by %c32_i32_118 dim 1 : vector<8x256xf32>, i32 -> vector<8x256xf32>
    %244 = arith.addf %242, %243 : vector<8x256xf32>
    %245 = vector.extract_strided_slice %244 {offsets = [0, 0], sizes = [8, 32], strides = [1, 1]} : vector<8x256xf32> to vector<8x32xf32>
    %246 = tpu.concatenate %236, %223 in 1 : vector<8x32xf32>, vector<8x32xf32> -> vector<8x64xf32>
    %c40_119 = arith.constant 40 : index
    %c0_120 = arith.constant 0 : index
    %247 = vector.load %arg9[%c40_119, %c0_120] : memref<64x160xf32, #tpu.memory_space<vmem>>, vector<8x160xf32>
    %248 = arith.addf %247, %9 : vector<8x160xf32>
    %cst_121 = arith.constant dense<0.000000e+00> : vector<8x160xf32>
    %249 = tpu.matmul %246, %14, %cst_121 {dimension_numbers = #tpu.dot_dimension_numbers<[1], [0], [0], [1], [0, 0, 1, 1], [], []>} : vector<8x64xf32>, vector<64x160xf32>, vector<8x160xf32> -> vector<8x160xf32>
    %250 = arith.addf %248, %249 : vector<8x160xf32>
    %251 = vector.extract_strided_slice %250 {offsets = [0, 0], sizes = [8, 128], strides = [1, 1]} : vector<8x160xf32> to vector<8x128xf32>
    %252 = arith.negf %251 : vector<8x128xf32>
    %253 = math.exp %252 : vector<8x128xf32>
    %cst_122 = arith.constant 1.000000e+00 : f32
    %254 = vector.broadcast %cst_122 : f32 to vector<8x128xf32>
    %255 = arith.addf %254, %253 : vector<8x128xf32>
    %256 = arith.divf %254, %255 : vector<8x128xf32>
    %257 = vector.extract_strided_slice %250 {offsets = [0, 128], sizes = [8, 32], strides = [1, 1]} : vector<8x160xf32> to vector<8x32xf32>
    %258 = math.tanh %257 : vector<8x32xf32>
    %259 = vector.extract_strided_slice %256 {offsets = [0, 0], sizes = [8, 32], strides = [1, 1]} : vector<8x128xf32> to vector<8x32xf32>
    %260 = vector.extract_strided_slice %256 {offsets = [0, 32], sizes = [8, 32], strides = [1, 1]} : vector<8x128xf32> to vector<8x32xf32>
    %261 = vector.extract_strided_slice %256 {offsets = [0, 64], sizes = [8, 32], strides = [1, 1]} : vector<8x128xf32> to vector<8x32xf32>
    %262 = vector.extract_strided_slice %256 {offsets = [0, 96], sizes = [8, 32], strides = [1, 1]} : vector<8x128xf32> to vector<8x32xf32>
    %263 = arith.mulf %261, %245 : vector<8x32xf32>
    %264 = arith.mulf %262, %221 : vector<8x32xf32>
    %265 = arith.addf %263, %264 : vector<8x32xf32>
    %266 = arith.mulf %259, %258 : vector<8x32xf32>
    %267 = arith.addf %265, %266 : vector<8x32xf32>
    %268 = math.tanh %267 : vector<8x32xf32>
    %269 = arith.mulf %260, %268 : vector<8x32xf32>
    %c0_123 = arith.constant 0 : index
    %c160 = arith.constant 160 : index
    %270 = vector.load %arg10[%c0_123, %c160] : memref<8x256xf32, #tpu.memory_space<vmem>>, vector<8x32xf32>
    tpu.vector_store %arg10[%c0_123, %c160], %269 {strides = array<i32>} : memref<8x256xf32, #tpu.memory_space<vmem>>, vector<8x32xf32>,
    %c0_124 = arith.constant 0 : index
    %c160_125 = arith.constant 160 : index
    %271 = vector.load %arg11[%c0_124, %c160_125] : memref<8x256xf32, #tpu.memory_space<vmem>>, vector<8x32xf32>
    tpu.vector_store %arg11[%c0_124, %c160_125], %267 {strides = array<i32>} : memref<8x256xf32, #tpu.memory_space<vmem>>, vector<8x32xf32>,
    %c40_126 = arith.constant 40 : index
    %c0_127 = arith.constant 0 : index
    %272 = vector.load %arg12[%c40_126, %c0_127] : memref<64x32xf32, #tpu.memory_space<vmem>>, vector<8x32xf32>
    tpu.vector_store %arg12[%c40_126, %c0_127], %269 {strides = array<i32>} : memref<64x32xf32, #tpu.memory_space<vmem>>, vector<8x32xf32>,
    %c48 = arith.constant 48 : index
    %c256_128 = arith.constant 256 : index
    %273 = vector.load %arg0[%c48, %c256_128] : memref<64x512xf32, #tpu.memory_space<vmem>>, vector<8x256xf32>
    %c0_129 = arith.constant 0 : index
    %c0_130 = arith.constant 0 : index
    %274 = vector.load %arg10[%c0_129, %c0_130] : memref<8x256xf32, #tpu.memory_space<vmem>>, vector<8x256xf32>
    %275 = arith.mulf %273, %274 : vector<8x256xf32>
    %c128_i32_131 = arith.constant 128 : i32
    %276 = tpu.dynamic_rotate %275 by %c128_i32_131 dim 1 : vector<8x256xf32>, i32 -> vector<8x256xf32>
    %277 = arith.addf %275, %276 : vector<8x256xf32>
    %c64_i32_132 = arith.constant 64 : i32
    %278 = tpu.dynamic_rotate %277 by %c64_i32_132 dim 1 : vector<8x256xf32>, i32 -> vector<8x256xf32>
    %279 = arith.addf %277, %278 : vector<8x256xf32>
    %c32_i32_133 = arith.constant 32 : i32
    %280 = tpu.dynamic_rotate %279 by %c32_i32_133 dim 1 : vector<8x256xf32>, i32 -> vector<8x256xf32>
    %281 = arith.addf %279, %280 : vector<8x256xf32>
    %282 = vector.extract_strided_slice %281 {offsets = [0, 0], sizes = [8, 32], strides = [1, 1]} : vector<8x256xf32> to vector<8x32xf32>
    %c0_134 = arith.constant 0 : index
    %c0_135 = arith.constant 0 : index
    %283 = vector.load %arg11[%c0_134, %c0_135] : memref<8x256xf32, #tpu.memory_space<vmem>>, vector<8x256xf32>
    %284 = arith.mulf %273, %283 : vector<8x256xf32>
    %c128_i32_136 = arith.constant 128 : i32
    %285 = tpu.dynamic_rotate %284 by %c128_i32_136 dim 1 : vector<8x256xf32>, i32 -> vector<8x256xf32>
    %286 = arith.addf %284, %285 : vector<8x256xf32>
    %c64_i32_137 = arith.constant 64 : i32
    %287 = tpu.dynamic_rotate %286 by %c64_i32_137 dim 1 : vector<8x256xf32>, i32 -> vector<8x256xf32>
    %288 = arith.addf %286, %287 : vector<8x256xf32>
    %c32_i32_138 = arith.constant 32 : i32
    %289 = tpu.dynamic_rotate %288 by %c32_i32_138 dim 1 : vector<8x256xf32>, i32 -> vector<8x256xf32>
    %290 = arith.addf %288, %289 : vector<8x256xf32>
    %291 = vector.extract_strided_slice %290 {offsets = [0, 0], sizes = [8, 32], strides = [1, 1]} : vector<8x256xf32> to vector<8x32xf32>
    %292 = tpu.concatenate %282, %269 in 1 : vector<8x32xf32>, vector<8x32xf32> -> vector<8x64xf32>
    %c48_139 = arith.constant 48 : index
    %c0_140 = arith.constant 0 : index
    %293 = vector.load %arg9[%c48_139, %c0_140] : memref<64x160xf32, #tpu.memory_space<vmem>>, vector<8x160xf32>
    %294 = arith.addf %293, %9 : vector<8x160xf32>
    %cst_141 = arith.constant dense<0.000000e+00> : vector<8x160xf32>
    %295 = tpu.matmul %292, %14, %cst_141 {dimension_numbers = #tpu.dot_dimension_numbers<[1], [0], [0], [1], [0, 0, 1, 1], [], []>} : vector<8x64xf32>, vector<64x160xf32>, vector<8x160xf32> -> vector<8x160xf32>
    %296 = arith.addf %294, %295 : vector<8x160xf32>
    %297 = vector.extract_strided_slice %296 {offsets = [0, 0], sizes = [8, 128], strides = [1, 1]} : vector<8x160xf32> to vector<8x128xf32>
    %298 = arith.negf %297 : vector<8x128xf32>
    %299 = math.exp %298 : vector<8x128xf32>
    %cst_142 = arith.constant 1.000000e+00 : f32
    %300 = vector.broadcast %cst_142 : f32 to vector<8x128xf32>
    %301 = arith.addf %300, %299 : vector<8x128xf32>
    %302 = arith.divf %300, %301 : vector<8x128xf32>
    %303 = vector.extract_strided_slice %296 {offsets = [0, 128], sizes = [8, 32], strides = [1, 1]} : vector<8x160xf32> to vector<8x32xf32>
    %304 = math.tanh %303 : vector<8x32xf32>
    %305 = vector.extract_strided_slice %302 {offsets = [0, 0], sizes = [8, 32], strides = [1, 1]} : vector<8x128xf32> to vector<8x32xf32>
    %306 = vector.extract_strided_slice %302 {offsets = [0, 32], sizes = [8, 32], strides = [1, 1]} : vector<8x128xf32> to vector<8x32xf32>
    %307 = vector.extract_strided_slice %302 {offsets = [0, 64], sizes = [8, 32], strides = [1, 1]} : vector<8x128xf32> to vector<8x32xf32>
    %308 = vector.extract_strided_slice %302 {offsets = [0, 96], sizes = [8, 32], strides = [1, 1]} : vector<8x128xf32> to vector<8x32xf32>
    %309 = arith.mulf %307, %291 : vector<8x32xf32>
    %310 = arith.mulf %308, %267 : vector<8x32xf32>
    %311 = arith.addf %309, %310 : vector<8x32xf32>
    %312 = arith.mulf %305, %304 : vector<8x32xf32>
    %313 = arith.addf %311, %312 : vector<8x32xf32>
    %314 = math.tanh %313 : vector<8x32xf32>
    %315 = arith.mulf %306, %314 : vector<8x32xf32>
    %c0_143 = arith.constant 0 : index
    %c192 = arith.constant 192 : index
    %316 = vector.load %arg10[%c0_143, %c192] : memref<8x256xf32, #tpu.memory_space<vmem>>, vector<8x32xf32>
    tpu.vector_store %arg10[%c0_143, %c192], %315 {strides = array<i32>} : memref<8x256xf32, #tpu.memory_space<vmem>>, vector<8x32xf32>,
    %c0_144 = arith.constant 0 : index
    %c192_145 = arith.constant 192 : index
    %317 = vector.load %arg11[%c0_144, %c192_145] : memref<8x256xf32, #tpu.memory_space<vmem>>, vector<8x32xf32>
    tpu.vector_store %arg11[%c0_144, %c192_145], %313 {strides = array<i32>} : memref<8x256xf32, #tpu.memory_space<vmem>>, vector<8x32xf32>,
    %c48_146 = arith.constant 48 : index
    %c0_147 = arith.constant 0 : index
    %318 = vector.load %arg12[%c48_146, %c0_147] : memref<64x32xf32, #tpu.memory_space<vmem>>, vector<8x32xf32>
    tpu.vector_store %arg12[%c48_146, %c0_147], %315 {strides = array<i32>} : memref<64x32xf32, #tpu.memory_space<vmem>>, vector<8x32xf32>,
    %c56 = arith.constant 56 : index
    %c256_148 = arith.constant 256 : index
    %319 = vector.load %arg0[%c56, %c256_148] : memref<64x512xf32, #tpu.memory_space<vmem>>, vector<8x256xf32>
    %c0_149 = arith.constant 0 : index
    %c0_150 = arith.constant 0 : index
    %320 = vector.load %arg10[%c0_149, %c0_150] : memref<8x256xf32, #tpu.memory_space<vmem>>, vector<8x256xf32>
    %321 = arith.mulf %319, %320 : vector<8x256xf32>
    %c128_i32_151 = arith.constant 128 : i32
    %322 = tpu.dynamic_rotate %321 by %c128_i32_151 dim 1 : vector<8x256xf32>, i32 -> vector<8x256xf32>
    %323 = arith.addf %321, %322 : vector<8x256xf32>
    %c64_i32_152 = arith.constant 64 : i32
    %324 = tpu.dynamic_rotate %323 by %c64_i32_152 dim 1 : vector<8x256xf32>, i32 -> vector<8x256xf32>
    %325 = arith.addf %323, %324 : vector<8x256xf32>
    %c32_i32_153 = arith.constant 32 : i32
    %326 = tpu.dynamic_rotate %325 by %c32_i32_153 dim 1 : vector<8x256xf32>, i32 -> vector<8x256xf32>
    %327 = arith.addf %325, %326 : vector<8x256xf32>
    %328 = vector.extract_strided_slice %327 {offsets = [0, 0], sizes = [8, 32], strides = [1, 1]} : vector<8x256xf32> to vector<8x32xf32>
    %c0_154 = arith.constant 0 : index
    %c0_155 = arith.constant 0 : index
    %329 = vector.load %arg11[%c0_154, %c0_155] : memref<8x256xf32, #tpu.memory_space<vmem>>, vector<8x256xf32>
    %330 = arith.mulf %319, %329 : vector<8x256xf32>
    %c128_i32_156 = arith.constant 128 : i32
    %331 = tpu.dynamic_rotate %330 by %c128_i32_156 dim 1 : vector<8x256xf32>, i32 -> vector<8x256xf32>
    %332 = arith.addf %330, %331 : vector<8x256xf32>
    %c64_i32_157 = arith.constant 64 : i32
    %333 = tpu.dynamic_rotate %332 by %c64_i32_157 dim 1 : vector<8x256xf32>, i32 -> vector<8x256xf32>
    %334 = arith.addf %332, %333 : vector<8x256xf32>
    %c32_i32_158 = arith.constant 32 : i32
    %335 = tpu.dynamic_rotate %334 by %c32_i32_158 dim 1 : vector<8x256xf32>, i32 -> vector<8x256xf32>
    %336 = arith.addf %334, %335 : vector<8x256xf32>
    %337 = vector.extract_strided_slice %336 {offsets = [0, 0], sizes = [8, 32], strides = [1, 1]} : vector<8x256xf32> to vector<8x32xf32>
    %338 = tpu.concatenate %328, %15 in 1 : vector<8x32xf32>, vector<8x32xf32> -> vector<8x64xf32>
    %c56_159 = arith.constant 56 : index
    %c0_160 = arith.constant 0 : index
    %339 = vector.load %arg9[%c56_159, %c0_160] : memref<64x160xf32, #tpu.memory_space<vmem>>, vector<8x160xf32>
    %340 = arith.addf %339, %9 : vector<8x160xf32>
    %cst_161 = arith.constant dense<0.000000e+00> : vector<8x160xf32>
    %341 = tpu.matmul %338, %14, %cst_161 {dimension_numbers = #tpu.dot_dimension_numbers<[1], [0], [0], [1], [0, 0, 1, 1], [], []>} : vector<8x64xf32>, vector<64x160xf32>, vector<8x160xf32> -> vector<8x160xf32>
    %342 = arith.addf %340, %341 : vector<8x160xf32>
    %343 = vector.extract_strided_slice %342 {offsets = [0, 0], sizes = [8, 128], strides = [1, 1]} : vector<8x160xf32> to vector<8x128xf32>
    %344 = arith.negf %343 : vector<8x128xf32>
    %345 = math.exp %344 : vector<8x128xf32>
    %cst_162 = arith.constant 1.000000e+00 : f32
    %346 = vector.broadcast %cst_162 : f32 to vector<8x128xf32>
    %347 = arith.addf %346, %345 : vector<8x128xf32>
    %348 = arith.divf %346, %347 : vector<8x128xf32>
    %349 = vector.extract_strided_slice %342 {offsets = [0, 128], sizes = [8, 32], strides = [1, 1]} : vector<8x160xf32> to vector<8x32xf32>
    %350 = math.tanh %349 : vector<8x32xf32>
    %351 = vector.extract_strided_slice %348 {offsets = [0, 0], sizes = [8, 32], strides = [1, 1]} : vector<8x128xf32> to vector<8x32xf32>
    %352 = vector.extract_strided_slice %348 {offsets = [0, 32], sizes = [8, 32], strides = [1, 1]} : vector<8x128xf32> to vector<8x32xf32>
    %353 = vector.extract_strided_slice %348 {offsets = [0, 64], sizes = [8, 32], strides = [1, 1]} : vector<8x128xf32> to vector<8x32xf32>
    %354 = vector.extract_strided_slice %348 {offsets = [0, 96], sizes = [8, 32], strides = [1, 1]} : vector<8x128xf32> to vector<8x32xf32>
    %355 = arith.mulf %353, %337 : vector<8x32xf32>
    %356 = arith.mulf %354, %15 : vector<8x32xf32>
    %357 = arith.addf %355, %356 : vector<8x32xf32>
    %358 = arith.mulf %351, %350 : vector<8x32xf32>
    %359 = arith.addf %357, %358 : vector<8x32xf32>
    %360 = math.tanh %359 : vector<8x32xf32>
    %361 = arith.mulf %352, %360 : vector<8x32xf32>
    %c0_163 = arith.constant 0 : index
    %c224 = arith.constant 224 : index
    %362 = vector.load %arg10[%c0_163, %c224] : memref<8x256xf32, #tpu.memory_space<vmem>>, vector<8x32xf32>
    tpu.vector_store %arg10[%c0_163, %c224], %361 {strides = array<i32>} : memref<8x256xf32, #tpu.memory_space<vmem>>, vector<8x32xf32>,
    %c0_164 = arith.constant 0 : index
    %c224_165 = arith.constant 224 : index
    %363 = vector.load %arg11[%c0_164, %c224_165] : memref<8x256xf32, #tpu.memory_space<vmem>>, vector<8x32xf32>
    tpu.vector_store %arg11[%c0_164, %c224_165], %359 {strides = array<i32>} : memref<8x256xf32, #tpu.memory_space<vmem>>, vector<8x32xf32>,
    %c56_166 = arith.constant 56 : index
    %c0_167 = arith.constant 0 : index
    %364 = vector.load %arg12[%c56_166, %c0_167] : memref<64x32xf32, #tpu.memory_space<vmem>>, vector<8x32xf32>
    tpu.vector_store %arg12[%c56_166, %c0_167], %361 {strides = array<i32>} : memref<64x32xf32, #tpu.memory_space<vmem>>, vector<8x32xf32>,
    %c0_168 = arith.constant 0 : index
    %c0_169 = arith.constant 0 : index
    %365 = vector.load %arg12[%c0_168, %c0_169] : memref<64x32xf32, #tpu.memory_space<vmem>>, vector<64x32xf32>
    %c0_170 = arith.constant 0 : index
    %c0_171 = arith.constant 0 : index
    %366 = vector.load %arg6[%c0_170, %c0_171] : memref<32x128xf32, #tpu.memory_space<vmem>>, vector<32x128xf32>
    %cst_172 = arith.constant dense<0.000000e+00> : vector<64x128xf32>
    %367 = tpu.matmul %365, %366, %cst_172 {dimension_numbers = #tpu.dot_dimension_numbers<[1], [0], [0], [1], [0, 0, 1, 1], [], []>} : vector<64x32xf32>, vector<32x128xf32>, vector<64x128xf32> -> vector<64x128xf32>
    %c0_173 = arith.constant 0 : index
    %c0_174 = arith.constant 0 : index
    %368 = vector.load %arg7[%c0_173, %c0_174] : memref<1x128xf32, #tpu.memory_space<vmem>>, vector<1x128xf32>
    %369 = vector.broadcast %368 : vector<1x128xf32> to vector<64x128xf32>
    %370 = arith.addf %367, %369 : vector<64x128xf32>
    %cst_175 = arith.constant dense<0xFF800000> : vector<64xf32>
    %371 = vector.multi_reduction <maximumf>, %370, %cst_175 [1] : vector<64x128xf32> to vector<64xf32>
    %372 = vector.shape_cast %371 : vector<64xf32> to vector<64x1xf32>
    %373 = vector.broadcast %372 : vector<64x1xf32> to vector<64x128xf32>
    %374 = arith.subf %370, %373 : vector<64x128xf32>
    %375 = math.exp %374 : vector<64x128xf32>
    %cst_176 = arith.constant dense<0.000000e+00> : vector<64xf32>
    %376 = vector.multi_reduction <add>, %375, %cst_176 [1] : vector<64x128xf32> to vector<64xf32>
    %377 = vector.shape_cast %376 : vector<64xf32> to vector<64x1xf32>
    %378 = math.log %377 : vector<64x1xf32>
    %379 = arith.addf %378, %372 : vector<64x1xf32>
    %380 = vector.broadcast %379 : vector<64x1xf32> to vector<64x128xf32>
    %381 = arith.subf %370, %380 : vector<64x128xf32>
    %c0_177 = arith.constant 0 : index
    %c0_178 = arith.constant 0 : index
    %382 = vector.load %arg8[%c0_177, %c0_178] : memref<64x128xf32, #tpu.memory_space<vmem>>, vector<64x128xf32>
    tpu.vector_store %arg8[%c0_177, %c0_178], %381 {strides = array<i32>} : memref<64x128xf32, #tpu.memory_space<vmem>>, vector<64x128xf32>,
    return
  }
}

</mosaic_0001>

<llo_original>
// kernel: tree_model_mdin_forward.1
$region0: #{tree_model_mdin_forward.1}
  #allocation0 [shape = 'u32[]', space=smem, size = 0x4, offset = 0x4, fixed_abs, tag = 'smem constant byte address 0x4 - core index']
  #allocation1 [shape = 'u32[144,128]{1,0:T(1,128)}', space=vmem, size = 0x12000, scoped, tag = 'internal scratch']
  #allocation2 [shape = 'f32[64,160]{1,0:T(8,128)}', space=vmem, size = 0x10000, scoped, tag = 'scratch operand']
  #allocation3 [shape = 'f32[8,256]{1,0:T(8,128)}', space=vmem, size = 0x2000, scoped, tag = 'scratch operand']
  #allocation4 [shape = 'f32[8,256]{1,0:T(8,128)}', space=vmem, size = 0x2000, scoped, tag = 'scratch operand']
  #allocation5 [shape = 'f32[64,32]{1,0:T(8,128)}', space=vmem, size = 0x8000, scoped, tag = 'scratch operand']
  %s0 = inlined_call_operand.vmem [shape: f32[64,512], index: 0, kind: input, shape index: {}]
  %s1 = inlined_call_operand.vmem [shape: f32[8,48], index: 1, kind: input, shape index: {}]
  %s2 = inlined_call_operand.vmem [shape: f32[256,160], index: 2, kind: input, shape index: {}]
  %s3 = inlined_call_operand.vmem [shape: f32[48,160], index: 3, kind: input, shape index: {}]
  %s4 = inlined_call_operand.vmem [shape: f32[1,160], index: 4, kind: input, shape index: {}]
  %s5 = inlined_call_operand.vmem [shape: f32[64,160], index: 5, kind: input, shape index: {}]
  %s6 = inlined_call_operand.vmem [shape: f32[32,128], index: 6, kind: input, shape index: {}]
  %s7 = inlined_call_operand.vmem [shape: f32[1,128], index: 7, kind: input, shape index: {}]
  %s8 = inlined_call_operand.vmem [shape: f32[64,128], index: 8, kind: output, shape index: {}]
  %s9 = sld [smem:[#allocation0]]
  $region42: #{tree_model_mdin_forward.1} parent=0
    _
  %s11 = ssub.s32 1, %s9
  %s12 = scalar_select 0, %s11, %s9
  // Predicated region
  $region2: #{tree_model_mdin_forward.1} parent=0 // pred_check
    _
  $region3: #{tree_model_mdin_forward.1} parent=0 // pred_check_branch
    %14 = sbr.rel (0) target = $region5
  $region4: #{tree_model_mdin_forward.1} parent=0 // pred_region
    _
  $region5: #{tree_model_mdin_forward.1} parent=0 // pred_fallthru
    _
  // Predicated region
  $region6: #{tree_model_mdin_forward.1} parent=0 // pred_check
    _
  $region7: #{tree_model_mdin_forward.1} parent=0 // pred_check_branch
    %16 = sbr.rel (0) target = $region9
  $region8: #{tree_model_mdin_forward.1} parent=0 // pred_region
    _
  $region9: #{tree_model_mdin_forward.1} parent=0 // pred_fallthru
    _
  // Predicated region
  $region10: #{tree_model_mdin_forward.1} parent=0 // pred_check
    _
  $region11: #{tree_model_mdin_forward.1} parent=0 // pred_check_branch
    %18 = sbr.rel (0) target = $region13
  $region12: #{tree_model_mdin_forward.1} parent=0 // pred_region
    _
  $region13: #{tree_model_mdin_forward.1} parent=0 // pred_fallthru
    _
  // Predicated region
  $region14: #{tree_model_mdin_forward.1} parent=0 // pred_check
    _
  $region15: #{tree_model_mdin_forward.1} parent=0 // pred_check_branch
    %20 = sbr.rel (0) target = $region17
  $region16: #{tree_model_mdin_forward.1} parent=0 // pred_region
    _
  $region17: #{tree_model_mdin_forward.1} parent=0 // pred_fallthru
    _
  // Predicated region
  $region18: #{tree_model_mdin_forward.1} parent=0 // pred_check
    _
  $region19: #{tree_model_mdin_forward.1} parent=0 // pred_check_branch
    %22 = sbr.rel (0) target = $region21
  $region20: #{tree_model_mdin_forward.1} parent=0 // pred_region
    _
  $region21: #{tree_model_mdin_forward.1} parent=0 // pred_fallthru
    _
  // Predicated region
  $region22: #{tree_model_mdin_forward.1} parent=0 // pred_check
    _
  $region23: #{tree_model_mdin_forward.1} parent=0 // pred_check_branch
    %24 = sbr.rel (0) target = $region25
  $region24: #{tree_model_mdin_forward.1} parent=0 // pred_region
    _
  $region25: #{tree_model_mdin_forward.1} parent=0 // pred_fallthru
    _
  // Predicated region
  $region26: #{tree_model_mdin_forward.1} parent=0 // pred_check
    _
  $region27: #{tree_model_mdin_forward.1} parent=0 // pred_check_branch
    %26 = sbr.rel (0) target = $region29
  $region28: #{tree_model_mdin_forward.1} parent=0 // pred_region
    _
  $region29: #{tree_model_mdin_forward.1} parent=0 // pred_fallthru
    _
  // Predicated region
  $region30: #{tree_model_mdin_forward.1} parent=0 // pred_check
    _
  $region31: #{tree_model_mdin_forward.1} parent=0 // pred_check_branch
    %28 = sbr.rel (0) target = $region33
  $region32: #{tree_model_mdin_forward.1} parent=0 // pred_region
    _
  $region33: #{tree_model_mdin_forward.1} parent=0 // pred_fallthru
    _
  %v29 = vld [vmem:[%s0] sm:$0xff]
  %v30 = vld [vmem:[%s0 + $0x8] sm:$0xff]
  %v31 = vld [vmem:[%s0 + $0x20] sm:$0xff]
  %v32 = vld [vmem:[%s0 + $0x28] sm:$0xff]
  %v33 = vld [vmem:[%s0 + $0x40] sm:$0xff]
  %v34 = vld [vmem:[%s0 + $0x48] sm:$0xff]
  %v35 = vld [vmem:[%s0 + $0x60] sm:$0xff]
  %v36 = vld [vmem:[%s0 + $0x68] sm:$0xff]
  %v37 = vld [vmem:[%s0 + $0x80] sm:$0xff]
  %v38 = vld [vmem:[%s0 + $0x88] sm:$0xff]
  %v39 = vld [vmem:[%s0 + $0xa0] sm:$0xff]
  %v40 = vld [vmem:[%s0 + $0xa8] sm:$0xff]
  %v41 = vld [vmem:[%s0 + $0xc0] sm:$0xff]
  %v42 = vld [vmem:[%s0 + $0xc8] sm:$0xff]
  %v43 = vld [vmem:[%s0 + $0xe0] sm:$0xff]
  %v44 = vld [vmem:[%s0 + $0xe8] sm:$0xff]
  %v45 = vld [vmem:[%s2] sm:$0xff]
  %v46 = vld [vmem:[%s2 + $0x8] sm:$0xff]
  %v47 = vld [vmem:[%s2 + $0x10] sm:$0xff]
  %v48 = vld [vmem:[%s2 + $0x18] sm:$0xff]
  %v49 = vld [vmem:[%s2 + $0x20] sm:$0xff]
  %v50 = vld [vmem:[%s2 + $0x28] sm:$0xff]
  %v51 = vld [vmem:[%s2 + $0x30] sm:$0xff]
  %v52 = vld [vmem:[%s2 + $0x38] sm:$0xff]
  %v53 = vld [vmem:[%s2 + $0x40] sm:$0xff]
  %v54 = vld [vmem:[%s2 + $0x48] sm:$0xff]
  %v55 = vld [vmem:[%s2 + $0x50] sm:$0xff]
  %v56 = vld [vmem:[%s2 + $0x58] sm:$0xff]
  %v57 = vld [vmem:[%s2 + $0x60] sm:$0xff]
  %v58 = vld [vmem:[%s2 + $0x68] sm:$0xff]
  %v59 = vld [vmem:[%s2 + $0x70] sm:$0xff]
  %v60 = vld [vmem:[%s2 + $0x78] sm:$0xff]
  %v61 = vld [vmem:[%s2 + $0x80] sm:$0xff]
  %v62 = vld [vmem:[%s2 + $0x88] sm:$0xff]
  %v63 = vld [vmem:[%s2 + $0x90] sm:$0xff]
  %v64 = vld [vmem:[%s2 + $0x98] sm:$0xff]
  %v65 = vld [vmem:[%s2 + $0xa0] sm:$0xff]
  %v66 = vld [vmem:[%s2 + $0xa8] sm:$0xff]
  %v67 = vld [vmem:[%s2 + $0xb0] sm:$0xff]
  %v68 = vld [vmem:[%s2 + $0xb8] sm:$0xff]
  %v69 = vld [vmem:[%s2 + $0xc0] sm:$0xff]
  %v70 = vld [vmem:[%s2 + $0xc8] sm:$0xff]
  %v71 = vld [vmem:[%s2 + $0xd0] sm:$0xff]
  %v72 = vld [vmem:[%s2 + $0xd8] sm:$0xff]
  %v73 = vld [vmem:[%s2 + $0xe0] sm:$0xff]
  %v74 = vld [vmem:[%s2 + $0xe8] sm:$0xff]
  %v75 = vld [vmem:[%s2 + $0xf0] sm:$0xff]
  %v76 = vld [vmem:[%s2 + $0xf8] sm:$0xff]
  %v77 = vld [vmem:[%s2 + $0x100] sm:$0xff]
  %v78 = vld [vmem:[%s2 + $0x108] sm:$0xff]
  %v79 = vld [vmem:[%s2 + $0x110] sm:$0xff]
  %v80 = vld [vmem:[%s2 + $0x118] sm:$0xff]
  %v81 = vld [vmem:[%s2 + $0x120] sm:$0xff]
  %v82 = vld [vmem:[%s2 + $0x128] sm:$0xff]
  %v83 = vld [vmem:[%s2 + $0x130] sm:$0xff]
  %v84 = vld [vmem:[%s2 + $0x138] sm:$0xff]
  %v85 = vld [vmem:[%s2 + $0x140] sm:$0xff]
  %v86 = vld [vmem:[%s2 + $0x148] sm:$0xff]
  %v87 = vld [vmem:[%s2 + $0x150] sm:$0xff]
  %v88 = vld [vmem:[%s2 + $0x158] sm:$0xff]
  %v89 = vld [vmem:[%s2 + $0x160] sm:$0xff]
  %v90 = vld [vmem:[%s2 + $0x168] sm:$0xff]
  %v91 = vld [vmem:[%s2 + $0x170] sm:$0xff]
  %v92 = vld [vmem:[%s2 + $0x178] sm:$0xff]
  %v93 = vld [vmem:[%s2 + $0x180] sm:$0xff]
  %v94 = vld [vmem:[%s2 + $0x188] sm:$0xff]
  %v95 = vld [vmem:[%s2 + $0x190] sm:$0xff]
  %v96 = vld [vmem:[%s2 + $0x198] sm:$0xff]
  %v97 = vld [vmem:[%s2 + $0x1a0] sm:$0xff]
  %v98 = vld [vmem:[%s2 + $0x1a8] sm:$0xff]
  %v99 = vld [vmem:[%s2 + $0x1b0] sm:$0xff]
  %v100 = vld [vmem:[%s2 + $0x1b8] sm:$0xff]
  %v101 = vld [vmem:[%s2 + $0x1c0] sm:$0xff]
  %v102 = vld [vmem:[%s2 + $0x1c8] sm:$0xff]
  %v103 = vld [vmem:[%s2 + $0x1d0] sm:$0xff]
  %v104 = vld [vmem:[%s2 + $0x1d8] sm:$0xff]
  %v105 = vld [vmem:[%s2 + $0x1e0] sm:$0xff]
  %v106 = vld [vmem:[%s2 + $0x1e8] sm:$0xff]
  %v107 = vld [vmem:[%s2 + $0x1f0] sm:$0xff]
  %v108 = vld [vmem:[%s2 + $0x1f8] sm:$0xff]
  %109 = vmatprep.subr.mxu0 %v76
  %110 = vmatpush1.msra.mxu0 %v75
  %111 = vmatprep.subr.mxu0 %v74
  %112 = vmatpush1.msra.mxu0 %v73
  %113 = vmatprep.subr.mxu0 %v72
  %114 = vmatpush1.msra.mxu0 %v71
  %115 = vmatprep.subr.mxu0 %v70
  %116 = vmatpush1.msra.mxu0 %v69
  %117 = vmatprep.subr.mxu0 %v68
  %118 = vmatpush1.msra.mxu0 %v67
  %119 = vmatprep.subr.mxu0 %v66
  %120 = vmatpush1.msra.mxu0 %v65
  %121 = vmatprep.subr.mxu0 %v64
  %122 = vmatpush1.msra.mxu0 %v63
  %123 = vmatprep.subr.mxu0 %v62
  %124 = vmatpush1.msra.mxu0 %v61
  %125 = vmatprep.subr.mxu0 %v60
  %126 = vmatpush1.msra.mxu0 %v59
  %127 = vmatprep.subr.mxu0 %v58
  %128 = vmatpush1.msra.mxu0 %v57
  %129 = vmatprep.subr.mxu0 %v56
  %130 = vmatpush1.msra.mxu0 %v55
  %131 = vmatprep.subr.mxu0 %v54
  %132 = vmatpush1.msra.mxu0 %v53
  %133 = vmatprep.subr.mxu0 %v52
  %134 = vmatpush1.msra.mxu0 %v51
  %135 = vmatprep.subr.mxu0 %v50
  %136 = vmatpush1.msra.mxu0 %v49
  %137 = vmatprep.subr.mxu0 %v48
  %138 = vmatpush1.msra.mxu0 %v47
  %139 = vmatprep.subr.mxu0 %v46
  %140 = vmatpush1.msra.mxu0 %v45
  %141 = vmatprep.subr.mxu0 %v108
  %142 = vmatpush2.msra.mxu0 %v107
  %143 = vmatprep.subr.mxu0 %v106
  %144 = vmatpush2.msra.mxu0 %v105
  %145 = vmatprep.subr.mxu0 %v104
  %146 = vmatpush2.msra.mxu0 %v103
  %147 = vmatprep.subr.mxu0 %v102
  %148 = vmatpush2.msra.mxu0 %v101
  %149 = vmatprep.subr.mxu0 %v100
  %150 = vmatpush2.msra.mxu0 %v99
  %151 = vmatprep.subr.mxu0 %v98
  %152 = vmatpush2.msra.mxu0 %v97
  %153 = vmatprep.subr.mxu0 %v96
  %154 = vmatpush2.msra.mxu0 %v95
  %155 = vmatprep.subr.mxu0 %v94
  %156 = vmatpush2.msra.mxu0 %v93
  %157 = vmatprep.subr.mxu0 %v92
  %158 = vmatpush2.msra.mxu0 %v91
  %159 = vmatprep.subr.mxu0 %v90
  %160 = vmatpush2.msra.mxu0 %v89
  %161 = vmatprep.subr.mxu0 %v88
  %162 = vmatpush2.msra.mxu0 %v87
  %163 = vmatprep.subr.mxu0 %v86
  %164 = vmatpush2.msra.mxu0 %v85
  %165 = vmatprep.subr.mxu0 %v84
  %166 = vmatpush2.msra.mxu0 %v83
  %167 = vmatprep.subr.mxu0 %v82
  %168 = vmatpush2.msra.mxu0 %v81
  %169 = vmatprep.subr.mxu0 %v80
  %170 = vmatpush2.msra.mxu0 %v79
  %171 = vmatprep.subr.mxu0 %v78
  %172 = vmatpush2.msra.mxu0 %v77
  %173 = vmatprep.mubr.f32.mxu0 %v30
  %174 = vmatmul.mubr.f32.gmra.mxu0 %v29
  %v175 = vpop.f32.mrf.mxu0
  %v176 = vadd.f32 0.0, %v175
  %v177 = vpop.f32.mrf.mxu0
  %v178 = vadd.f32 0.0, %v177
  %179 = vmatprep.mubr.f32.mxu0 %v32
  %180 = vmatmul.mubr.f32.gmra.mxu0 %v31
  %v181 = vpop.f32.mrf.mxu0
  %v182 = vadd.f32 0.0, %v181
  %v183 = vpop.f32.mrf.mxu0
  %v184 = vadd.f32 0.0, %v183
  %185 = vmatprep.mubr.f32.mxu0 %v34
  %186 = vmatmul.mubr.f32.gmra.mxu0 %v33
  %v187 = vpop.f32.mrf.mxu0
  %v188 = vadd.f32 0.0, %v187
  %v189 = vpop.f32.mrf.mxu0
  %v190 = vadd.f32 0.0, %v189
  %191 = vmatprep.mubr.f32.mxu0 %v36
  %192 = vmatmul.mubr.f32.gmra.mxu0 %v35
  %v193 = vpop.f32.mrf.mxu0
  %v194 = vadd.f32 0.0, %v193
  %v195 = vpop.f32.mrf.mxu0
  %v196 = vadd.f32 0.0, %v195
  %197 = vmatprep.mubr.f32.mxu0 %v38
  %198 = vmatmul.mubr.f32.gmra.mxu0 %v37
  %v199 = vpop.f32.mrf.mxu0
  %v200 = vadd.f32 0.0, %v199
  %v201 = vpop.f32.mrf.mxu0
  %v202 = vadd.f32 0.0, %v201
  %203 = vmatprep.mubr.f32.mxu0 %v40
  %204 = vmatmul.mubr.f32.gmra.mxu0 %v39
  %v205 = vpop.f32.mrf.mxu0
  %v206 = vadd.f32 0.0, %v205
  %v207 = vpop.f32.mrf.mxu0
  %v208 = vadd.f32 0.0, %v207
  %209 = vmatprep.mubr.f32.mxu0 %v42
  %210 = vmatmul.mubr.f32.gmra.mxu0 %v41
  %v211 = vpop.f32.mrf.mxu0
  %v212 = vadd.f32 0.0, %v211
  %v213 = vpop.f32.mrf.mxu0
  %v214 = vadd.f32 0.0, %v213
  %215 = vmatprep.mubr.f32.mxu0 %v44
  %216 = vmatmul.mubr.f32.gmra.mxu0 %v43
  %v217 = vpop.f32.mrf.mxu0
  %v218 = vadd.f32 0.0, %v217
  %v219 = vpop.f32.mrf.mxu0
  %v220 = vadd.f32 0.0, %v219
  %221 = vdwg.mxu0
  %222 = vst [vmem:[#allocation2] sm:$0xff] %v176
  %vm223 = vcmask 261120
  %224 = vst.msk [vmem:[#allocation2 + $0x8] sm:$0xff] %vm223, %v178
  %225 = vst [vmem:[#allocation2 + $0x10] sm:$0xff] %v182
  %226 = vst.msk [vmem:[#allocation2 + $0x18] sm:$0xff] %vm223, %v184
  %227 = vst [vmem:[#allocation2 + $0x20] sm:$0xff] %v188
  %228 = vst.msk [vmem:[#allocation2 + $0x28] sm:$0xff] %vm223, %v190
  %229 = vst [vmem:[#allocation2 + $0x30] sm:$0xff] %v194
  %230 = vst.msk [vmem:[#allocation2 + $0x38] sm:$0xff] %vm223, %v196
  %231 = vst [vmem:[#allocation2 + $0x40] sm:$0xff] %v200
  %232 = vst.msk [vmem:[#allocation2 + $0x48] sm:$0xff] %vm223, %v202
  %233 = vst [vmem:[#allocation2 + $0x50] sm:$0xff] %v206
  %234 = vst.msk [vmem:[#allocation2 + $0x58] sm:$0xff] %vm223, %v208
  %235 = vst [vmem:[#allocation2 + $0x60] sm:$0xff] %v212
  %236 = vst.msk [vmem:[#allocation2 + $0x68] sm:$0xff] %vm223, %v214
  %237 = vst [vmem:[#allocation2 + $0x70] sm:$0xff] %v218
  %238 = vst.msk [vmem:[#allocation2 + $0x78] sm:$0xff] %vm223, %v220
  %v239 = vld [vmem:[%s1] sm:$0xff]
  %v240 = vld [vmem:[%s3] sm:$0xff]
  %v241 = vld [vmem:[%s3 + $0x8] sm:$0xff]
  %v242 = vld [vmem:[%s3 + $0x10] sm:$0xff]
  %v243 = vld [vmem:[%s3 + $0x18] sm:$0xff]
  %v244 = vld [vmem:[%s3 + $0x20] sm:$0xff]
  %v245 = vld [vmem:[%s3 + $0x28] sm:$0xff]
  %v246 = vld [vmem:[%s3 + $0x30] sm:$0xff]
  %v247 = vld [vmem:[%s3 + $0x38] sm:$0xff]
  %v248 = vld [vmem:[%s3 + $0x40] sm:$0xff]
  %v249 = vld [vmem:[%s3 + $0x48] sm:$0xff]
  %v250 = vld [vmem:[%s3 + $0x50] sm:$0xff]
  %v251 = vld [vmem:[%s3 + $0x58] sm:$0xff]
  %v252 = vld [vmem:[%s4] sm:$0x3]
  %v254 = vlaneseq
  %v255 = vshrl.u32 %v254, 7
  %v256 = vsub.s32 0, %v255
  %v257 = vrot.slane %v252, %v256
  %v258 = vlaneseq
  %v259 = vshrl.u32 %v258, 7
  %v260 = vsub.s32 1, %v259
  %v261 = vrot.slane %v252, %v260
  %vm264 = vcmask 392192
  %v266 = vsel %vm264, %v239, 0
  %268 = vmatprep.subr.mxu0 0.0
  %269 = vmatpush1.msra.mxu0 0.0
  %270 = vmatprep.subr.mxu0 0.0
  %271 = vmatpush1.msra.mxu0 0.0
  %272 = vmatprep.subr.mxu0 0.0
  %273 = vmatpush1.msra.mxu0 0.0
  %274 = vmatprep.subr.mxu0 0.0
  %275 = vmatpush1.msra.mxu0 0.0
  %276 = vmatprep.subr.mxu0 0.0
  %277 = vmatpush1.msra.mxu0 0.0
  %278 = vmatprep.subr.mxu0 0.0
  %279 = vmatpush1.msra.mxu0 0.0
  %280 = vmatprep.subr.mxu0 0.0
  %281 = vmatpush1.msra.mxu0 0.0
  %282 = vmatprep.subr.mxu0 0.0
  %283 = vmatpush1.msra.mxu0 0.0
  %284 = vmatprep.subr.mxu0 0.0
  %285 = vmatpush1.msra.mxu0 0.0
  %286 = vmatprep.subr.mxu0 0.0
  %287 = vmatpush1.msra.mxu0 0.0
  %288 = vmatprep.subr.mxu0 %v251
  %289 = vmatpush1.msra.mxu0 %v250
  %290 = vmatprep.subr.mxu0 %v249
  %291 = vmatpush1.msra.mxu0 %v248
  %292 = vmatprep.subr.mxu0 %v247
  %293 = vmatpush1.msra.mxu0 %v246
  %294 = vmatprep.subr.mxu0 %v245
  %295 = vmatpush1.msra.mxu0 %v244
  %296 = vmatprep.subr.mxu0 %v243
  %297 = vmatpush1.msra.mxu0 %v242
  %298 = vmatprep.subr.mxu0 %v241
  %299 = vmatpush1.msra.mxu0 %v240
  %300 = vmatprep.subr.mxu0 0.0
  %301 = vmatpush2.msra.mxu0 0.0
  %302 = vmatprep.subr.mxu0 0.0
  %303 = vmatpush2.msra.mxu0 0.0
  %304 = vmatprep.subr.mxu0 0.0
  %305 = vmatpush2.msra.mxu0 0.0
  %306 = vmatprep.subr.mxu0 0.0
  %307 = vmatpush2.msra.mxu0 0.0
  %308 = vmatprep.subr.mxu0 0.0
  %309 = vmatpush2.msra.mxu0 0.0
  %310 = vmatprep.subr.mxu0 0.0
  %311 = vmatpush2.msra.mxu0 0.0
  %312 = vmatprep.subr.mxu0 0.0
  %313 = vmatpush2.msra.mxu0 0.0
  %314 = vmatprep.subr.mxu0 0.0
  %315 = vmatpush2.msra.mxu0 0.0
  %316 = vmatprep.subr.mxu0 0.0
  %317 = vmatpush2.msra.mxu0 0.0
  %318 = vmatprep.subr.mxu0 0.0
  %319 = vmatpush2.msra.mxu0 0.0
  %320 = vmatprep.subr.mxu0 0.0
  %321 = vmatpush2.msra.mxu0 0.0
  %322 = vmatprep.subr.mxu0 0.0
  %323 = vmatpush2.msra.mxu0 0.0
  %324 = vmatprep.subr.mxu0 0.0
  %325 = vmatpush2.msra.mxu0 0.0
  %326 = vmatprep.subr.mxu0 0.0
  %327 = vmatpush2.msra.mxu0 0.0
  %328 = vmatprep.subr.mxu0 0.0
  %329 = vmatpush2.msra.mxu0 0.0
  %330 = vmatprep.subr.mxu0 0.0
  %331 = vmatpush2.msra.mxu0 0.0
  %332 = vmatprep.mubr.f32.mxu0 0.0
  %333 = vmatmul.mubr.f32.gmra.mxu0 %v266
  %v334 = vpop.f32.mrf.mxu0
  %v335 = vadd.f32 %v257, %v334
  %v336 = vpop.f32.mrf.mxu0
  %v337 = vadd.f32 %v261, %v336
  %338 = vdwg.mxu0
  %339 = vst [vmem:[#allocation3] sm:$0xff] 0.0
  %340 = vst [vmem:[#allocation3 + $0x8] sm:$0xff] 0.0
  %341 = vst [vmem:[#allocation4] sm:$0xff] 0.0
  %342 = vst [vmem:[#allocation4 + $0x8] sm:$0xff] 0.0
  %v343 = vld [vmem:[%s5] sm:$0xff]
  %v344 = vld [vmem:[%s5 + $0x8] sm:$0xff]
  %v345 = vld [vmem:[%s5 + $0x10] sm:$0xff]
  %v346 = vld [vmem:[%s5 + $0x18] sm:$0xff]
  %v347 = vld [vmem:[%s5 + $0x20] sm:$0xff]
  %v348 = vld [vmem:[%s5 + $0x28] sm:$0xff]
  %v349 = vld [vmem:[%s5 + $0x30] sm:$0xff]
  %v350 = vld [vmem:[%s5 + $0x38] sm:$0xff]
  %v351 = vld [vmem:[%s5 + $0x40] sm:$0xff]
  %v352 = vld [vmem:[%s5 + $0x48] sm:$0xff]
  %v353 = vld [vmem:[%s5 + $0x50] sm:$0xff]
  %v354 = vld [vmem:[%s5 + $0x58] sm:$0xff]
  %v355 = vld [vmem:[%s5 + $0x60] sm:$0xff]
  %v356 = vld [vmem:[%s5 + $0x68] sm:$0xff]
  %v357 = vld [vmem:[%s5 + $0x70] sm:$0xff]
  %v358 = vld [vmem:[%s5 + $0x78] sm:$0xff]
  %v359 = vld [vmem:[#allocation2] sm:$0xff]
  %v360 = vld [vmem:[#allocation2 + $0x8] sm:$0xff]
  %v361 = vadd.f32 %v359, %v335
  %v362 = vadd.f32 %v360, %v337
  %vm363 = vcmask 523264
  %v365 = vsel %vm363, 0.0, 0
  %367 = vmatprep.subr.mxu0 0.0
  %368 = vmatpush1.msra.mxu0 0.0
  %369 = vmatprep.subr.mxu0 0.0
  %370 = vmatpush1.msra.mxu0 0.0
  %371 = vmatprep.subr.mxu0 0.0
  %372 = vmatpush1.msra.mxu0 0.0
  %373 = vmatprep.subr.mxu0 0.0
  %374 = vmatpush1.msra.mxu0 0.0
  %375 = vmatprep.subr.mxu0 0.0
  %376 = vmatpush1.msra.mxu0 0.0
  %377 = vmatprep.subr.mxu0 0.0
  %378 = vmatpush1.msra.mxu0 0.0
  %379 = vmatprep.subr.mxu0 0.0
  %380 = vmatpush1.msra.mxu0 0.0
  %381 = vmatprep.subr.mxu0 0.0
  %382 = vmatpush1.msra.mxu0 0.0
  %383 = vmatprep.subr.mxu0 %v358
  %384 = vmatpush1.msra.mxu0 %v357
  %385 = vmatprep.subr.mxu0 %v356
  %386 = vmatpush1.msra.mxu0 %v355
  %387 = vmatprep.subr.mxu0 %v354
  %388 = vmatpush1.msra.mxu0 %v353
  %389 = vmatprep.subr.mxu0 %v352
  %390 = vmatpush1.msra.mxu0 %v351
  %391 = vmatprep.subr.mxu0 %v350
  %392 = vmatpush1.msra.mxu0 %v349
  %393 = vmatprep.subr.mxu0 %v348
  %394 = vmatpush1.msra.mxu0 %v347
  %395 = vmatprep.subr.mxu0 %v346
  %396 = vmatpush1.msra.mxu0 %v345
  %397 = vmatprep.subr.mxu0 %v344
  %398 = vmatpush1.msra.mxu0 %v343
  %399 = vmatprep.subr.mxu0 0.0
  %400 = vmatpush2.msra.mxu0 0.0
  %401 = vmatprep.subr.mxu0 0.0
  %402 = vmatpush2.msra.mxu0 0.0
  %403 = vmatprep.subr.mxu0 0.0
  %404 = vmatpush2.msra.mxu0 0.0
  %405 = vmatprep.subr.mxu0 0.0
  %406 = vmatpush2.msra.mxu0 0.0
  %407 = vmatprep.subr.mxu0 0.0
  %408 = vmatpush2.msra.mxu0 0.0
  %409 = vmatprep.subr.mxu0 0.0
  %410 = vmatpush2.msra.mxu0 0.0
  %411 = vmatprep.subr.mxu0 0.0
  %412 = vmatpush2.msra.mxu0 0.0
  %413 = vmatprep.subr.mxu0 0.0
  %414 = vmatpush2.msra.mxu0 0.0
  %415 = vmatprep.subr.mxu0 0.0
  %416 = vmatpush2.msra.mxu0 0.0
  %417 = vmatprep.subr.mxu0 0.0
  %418 = vmatpush2.msra.mxu0 0.0
  %419 = vmatprep.subr.mxu0 0.0
  %420 = vmatpush2.msra.mxu0 0.0
  %421 = vmatprep.subr.mxu0 0.0
  %422 = vmatpush2.msra.mxu0 0.0
  %423 = vmatprep.subr.mxu0 0.0
  %424 = vmatpush2.msra.mxu0 0.0
  %425 = vmatprep.subr.mxu0 0.0
  %426 = vmatpush2.msra.mxu0 0.0
  %427 = vmatprep.subr.mxu0 0.0
  %428 = vmatpush2.msra.mxu0 0.0
  %429 = vmatprep.subr.mxu0 0.0
  %430 = vmatpush2.msra.mxu0 0.0
  %431 = vmatprep.mubr.f32.mxu0 0.0
  %432 = vmatmul.mubr.f32.gmra.mxu0 %v365
  %v433 = vpop.f32.mrf.mxu0
  %v434 = vadd.f32 0.0, %v433
  %v435 = vpop.f32.mrf.mxu0
  %v436 = vadd.f32 0.0, %v435
  %437 = vdwg.mxu0
  %v438 = vadd.f32 %v361, %v434
  %v439 = vadd.f32 %v362, %v436
  %v440 = vxor.u32 %v438, 2147483648
  %v441 = vmul.f32 %v440, 1.442695
  %v442 = vpow.pop %v441
  %v443 = vadd.f32 %v442, 1.0
  %v444 = vrcp.pop %v443
  %v445 = vmul.f32 1.0, %v444
  %v446 = vtanh.pop %v439
  %v447 = vmul.f32 %v445, 0.0
  %449 = vrot.lane.b32.xlu0 %v447, 96
  %v450 = vpop.permute.xlu0 %449
  %v452 = vadd.f32 %v447, %v450
  %v453 = vmul.f32 %v445, %v446
  %455 = vrot.lane.b32.xlu0 %v453, 64
  %v456 = vpop.permute.xlu0 %455
  %v458 = vadd.f32 %v452, %v456
  %v459 = vtanh.pop %v458
  %461 = vrot.lane.b32.xlu0 %v459, 96
  %v462 = vpop.permute.xlu0 %461
  %v464 = vmul.f32 %v445, %v462
  %466 = vrot.lane.b32.xlu0 %v464, 96
  %v467 = vpop.permute.xlu0 %466
  %469 = vst.msk [vmem:[#allocation3] sm:$0xff] %vm223, %v467
  %471 = vrot.lane.b32.xlu0 %v458, 64
  %v472 = vpop.permute.xlu0 %471
  %474 = vst.msk [vmem:[#allocation4] sm:$0xff] %vm223, %v472
  %475 = vst.msk [vmem:[#allocation5] sm:$0xff] %vm223, %v467
  %v476 = vld [vmem:[%s0 + $0x30] sm:$0xff]
  %v477 = vld [vmem:[%s0 + $0x38] sm:$0xff]
  %v478 = vld [vmem:[#allocation3] sm:$0xff]
  %v479 = vld [vmem:[#allocation3 + $0x8] sm:$0xff]
  %v480 = vmul.f32 %v476, %v478
  %v481 = vmul.f32 %v477, %v479
  %v482 = vadd.f32 %v480, %v481
  %483 = vrot.lane.b32.xlu0 %v482, 64
  %v484 = vpop.permute.xlu0 %483
  %v485 = vlaneseq
  %v486 = vand.u32 %v485, 127
  %v487 = vadd.f32 %v482, %v484
  %488 = vrot.lane.b32.xlu0 %v487, 32
  %v489 = vpop.permute.xlu0 %488
  %v490 = vadd.f32 %v487, %v489
  %v491 = vld [vmem:[#allocation4] sm:$0xff]
  %v492 = vld [vmem:[#allocation4 + $0x8] sm:$0xff]
  %v493 = vmul.f32 %v476, %v491
  %v494 = vmul.f32 %v477, %v492
  %v495 = vadd.f32 %v493, %v494
  %496 = vrot.lane.b32.xlu0 %v495, 64
  %v497 = vpop.permute.xlu0 %496
  %v498 = vadd.f32 %v495, %v497
  %499 = vrot.lane.b32.xlu0 %v498, 32
  %v500 = vpop.permute.xlu0 %499
  %v501 = vadd.f32 %v498, %v500
  %v502 = vsel %vm223, %v490, 0.0
  %v503 = vld [vmem:[#allocation2 + $0x10] sm:$0xff]
  %v504 = vld [vmem:[#allocation2 + $0x18] sm:$0xff]
  %v505 = vadd.f32 %v503, %v335
  %v506 = vadd.f32 %v504, %v337
  %v508 = vsel %vm363, %v502, 0
  %510 = vmatprep.subr.mxu0 0.0
  %511 = vmatpush1.msra.mxu0 0.0
  %512 = vmatprep.subr.mxu0 0.0
  %513 = vmatpush1.msra.mxu0 0.0
  %514 = vmatprep.subr.mxu0 0.0
  %515 = vmatpush1.msra.mxu0 0.0
  %516 = vmatprep.subr.mxu0 0.0
  %517 = vmatpush1.msra.mxu0 0.0
  %518 = vmatprep.subr.mxu0 0.0
  %519 = vmatpush1.msra.mxu0 0.0
  %520 = vmatprep.subr.mxu0 0.0
  %521 = vmatpush1.msra.mxu0 0.0
  %522 = vmatprep.subr.mxu0 0.0
  %523 = vmatpush1.msra.mxu0 0.0
  %524 = vmatprep.subr.mxu0 0.0
  %525 = vmatpush1.msra.mxu0 0.0
  %526 = vmatprep.subr.mxu0 %v358
  %527 = vmatpush1.msra.mxu0 %v357
  %528 = vmatprep.subr.mxu0 %v356
  %529 = vmatpush1.msra.mxu0 %v355
  %530 = vmatprep.subr.mxu0 %v354
  %531 = vmatpush1.msra.mxu0 %v353
  %532 = vmatprep.subr.mxu0 %v352
  %533 = vmatpush1.msra.mxu0 %v351
  %534 = vmatprep.subr.mxu0 %v350
  %535 = vmatpush1.msra.mxu0 %v349
  %536 = vmatprep.subr.mxu0 %v348
  %537 = vmatpush1.msra.mxu0 %v347
  %538 = vmatprep.subr.mxu0 %v346
  %539 = vmatpush1.msra.mxu0 %v345
  %540 = vmatprep.subr.mxu0 %v344
  %541 = vmatpush1.msra.mxu0 %v343
  %542 = vmatprep.subr.mxu0 0.0
  %543 = vmatpush2.msra.mxu0 0.0
  %544 = vmatprep.subr.mxu0 0.0
  %545 = vmatpush2.msra.mxu0 0.0
  %546 = vmatprep.subr.mxu0 0.0
  %547 = vmatpush2.msra.mxu0 0.0
  %548 = vmatprep.subr.mxu0 0.0
  %549 = vmatpush2.msra.mxu0 0.0
  %550 = vmatprep.subr.mxu0 0.0
  %551 = vmatpush2.msra.mxu0 0.0
  %552 = vmatprep.subr.mxu0 0.0
  %553 = vmatpush2.msra.mxu0 0.0
  %554 = vmatprep.subr.mxu0 0.0
  %555 = vmatpush2.msra.mxu0 0.0
  %556 = vmatprep.subr.mxu0 0.0
  %557 = vmatpush2.msra.mxu0 0.0
  %558 = vmatprep.subr.mxu0 0.0
  %559 = vmatpush2.msra.mxu0 0.0
  %560 = vmatprep.subr.mxu0 0.0
  %561 = vmatpush2.msra.mxu0 0.0
  %562 = vmatprep.subr.mxu0 0.0
  %563 = vmatpush2.msra.mxu0 0.0
  %564 = vmatprep.subr.mxu0 0.0
  %565 = vmatpush2.msra.mxu0 0.0
  %566 = vmatprep.subr.mxu0 0.0
  %567 = vmatpush2.msra.mxu0 0.0
  %568 = vmatprep.subr.mxu0 0.0
  %569 = vmatpush2.msra.mxu0 0.0
  %570 = vmatprep.subr.mxu0 0.0
  %571 = vmatpush2.msra.mxu0 0.0
  %572 = vmatprep.subr.mxu0 0.0
  %573 = vmatpush2.msra.mxu0 0.0
  %574 = vmatprep.mubr.f32.mxu0 0.0
  %575 = vmatmul.mubr.f32.gmra.mxu0 %v508
  %v576 = vpop.f32.mrf.mxu0
  %v577 = vadd.f32 0.0, %v576
  %v578 = vpop.f32.mrf.mxu0
  %v579 = vadd.f32 0.0, %v578
  %580 = vdwg.mxu0
  %v581 = vadd.f32 %v505, %v577
  %v582 = vadd.f32 %v506, %v579
  %v583 = vxor.u32 %v581, 2147483648
  %v584 = vmul.f32 %v583, 1.442695
  %v585 = vpow.pop %v584
  %v586 = vadd.f32 %v585, 1.0
  %v587 = vrcp.pop %v586
  %v588 = vmul.f32 1.0, %v587
  %v589 = vtanh.pop %v582
  %591 = vrot.lane.b32.xlu0 %v501, 64
  %v592 = vpop.permute.xlu0 %591
  %v594 = vmul.f32 %v588, %v592
  %v595 = vmul.f32 %v588, 0.0
  %597 = vrot.lane.b32.xlu0 %v595, 96
  %v598 = vpop.permute.xlu0 %597
  %v600 = vadd.f32 %v594, %v598
  %v601 = vmul.f32 %v588, %v589
  %603 = vrot.lane.b32.xlu0 %v601, 64
  %v604 = vpop.permute.xlu0 %603
  %v606 = vadd.f32 %v600, %v604
  %v607 = vtanh.pop %v606
  %609 = vrot.lane.b32.xlu0 %v607, 96
  %v610 = vpop.permute.xlu0 %609
  %v612 = vmul.f32 %v588, %v610
  %vm613 = vcmask 523520
  %614 = vst.msk [vmem:[#allocation3] sm:$0xff] %vm613, %v612
  %616 = vrot.lane.b32.xlu0 %v606, 96
  %v617 = vpop.permute.xlu0 %616
  %619 = vst.msk [vmem:[#allocation4] sm:$0xff] %vm613, %v617
  %621 = vrot.lane.b32.xlu0 %v612, 96
  %v622 = vpop.permute.xlu0 %621
  %624 = vst.msk [vmem:[#allocation5 + $0x8] sm:$0xff] %vm223, %v622
  %v625 = vld [vmem:[%s0 + $0x50] sm:$0xff]
  %v626 = vld [vmem:[%s0 + $0x58] sm:$0xff]
  %v627 = vld [vmem:[#allocation3] sm:$0xff]
  %v628 = vld [vmem:[#allocation3 + $0x8] sm:$0xff]
  %v629 = vmul.f32 %v625, %v627
  %v630 = vmul.f32 %v626, %v628
  %v631 = vadd.f32 %v629, %v630
  %632 = vrot.lane.b32.xlu0 %v631, 64
  %v633 = vpop.permute.xlu0 %632
  %v634 = vadd.f32 %v631, %v633
  %635 = vrot.lane.b32.xlu0 %v634, 32
  %v636 = vpop.permute.xlu0 %635
  %v637 = vadd.f32 %v634, %v636
  %v638 = vld [vmem:[#allocation4] sm:$0xff]
  %v639 = vld [vmem:[#allocation4 + $0x8] sm:$0xff]
  %v640 = vmul.f32 %v625, %v638
  %v641 = vmul.f32 %v626, %v639
  %v642 = vadd.f32 %v640, %v641
  %643 = vrot.lane.b32.xlu0 %v642, 64
  %v644 = vpop.permute.xlu0 %643
  %v645 = vadd.f32 %v642, %v644
  %646 = vrot.lane.b32.xlu0 %v645, 32
  %v647 = vpop.permute.xlu0 %646
  %v648 = vadd.f32 %v645, %v647
  %v649 = vsel %vm223, %v637, %v612
  %v650 = vld [vmem:[#allocation2 + $0x20] sm:$0xff]
  %v651 = vld [vmem:[#allocation2 + $0x28] sm:$0xff]
  %v652 = vadd.f32 %v650, %v335
  %v653 = vadd.f32 %v651, %v337
  %v655 = vsel %vm363, %v649, 0
  %657 = vmatprep.subr.mxu0 0.0
  %658 = vmatpush1.msra.mxu0 0.0
  %659 = vmatprep.subr.mxu0 0.0
  %660 = vmatpush1.msra.mxu0 0.0
  %661 = vmatprep.subr.mxu0 0.0
  %662 = vmatpush1.msra.mxu0 0.0
  %663 = vmatprep.subr.mxu0 0.0
  %664 = vmatpush1.msra.mxu0 0.0
  %665 = vmatprep.subr.mxu0 0.0
  %666 = vmatpush1.msra.mxu0 0.0
  %667 = vmatprep.subr.mxu0 0.0
  %668 = vmatpush1.msra.mxu0 0.0
  %669 = vmatprep.subr.mxu0 0.0
  %670 = vmatpush1.msra.mxu0 0.0
  %671 = vmatprep.subr.mxu0 0.0
  %672 = vmatpush1.msra.mxu0 0.0
  %673 = vmatprep.subr.mxu0 %v358
  %674 = vmatpush1.msra.mxu0 %v357
  %675 = vmatprep.subr.mxu0 %v356
  %676 = vmatpush1.msra.mxu0 %v355
  %677 = vmatprep.subr.mxu0 %v354
  %678 = vmatpush1.msra.mxu0 %v353
  %679 = vmatprep.subr.mxu0 %v352
  %680 = vmatpush1.msra.mxu0 %v351
  %681 = vmatprep.subr.mxu0 %v350
  %682 = vmatpush1.msra.mxu0 %v349
  %683 = vmatprep.subr.mxu0 %v348
  %684 = vmatpush1.msra.mxu0 %v347
  %685 = vmatprep.subr.mxu0 %v346
  %686 = vmatpush1.msra.mxu0 %v345
  %687 = vmatprep.subr.mxu0 %v344
  %688 = vmatpush1.msra.mxu0 %v343
  %689 = vmatprep.subr.mxu0 0.0
  %690 = vmatpush2.msra.mxu0 0.0
  %691 = vmatprep.subr.mxu0 0.0
  %692 = vmatpush2.msra.mxu0 0.0
  %693 = vmatprep.subr.mxu0 0.0
  %694 = vmatpush2.msra.mxu0 0.0
  %695 = vmatprep.subr.mxu0 0.0
  %696 = vmatpush2.msra.mxu0 0.0
  %697 = vmatprep.subr.mxu0 0.0
  %698 = vmatpush2.msra.mxu0 0.0
  %699 = vmatprep.subr.mxu0 0.0
  %700 = vmatpush2.msra.mxu0 0.0
  %701 = vmatprep.subr.mxu0 0.0
  %702 = vmatpush2.msra.mxu0 0.0
  %703 = vmatprep.subr.mxu0 0.0
  %704 = vmatpush2.msra.mxu0 0.0
  %705 = vmatprep.subr.mxu0 0.0
  %706 = vmatpush2.msra.mxu0 0.0
  %707 = vmatprep.subr.mxu0 0.0
  %708 = vmatpush2.msra.mxu0 0.0
  %709 = vmatprep.subr.mxu0 0.0
  %710 = vmatpush2.msra.mxu0 0.0
  %711 = vmatprep.subr.mxu0 0.0
  %712 = vmatpush2.msra.mxu0 0.0
  %713 = vmatprep.subr.mxu0 0.0
  %714 = vmatpush2.msra.mxu0 0.0
  %715 = vmatprep.subr.mxu0 0.0
  %716 = vmatpush2.msra.mxu0 0.0
  %717 = vmatprep.subr.mxu0 0.0
  %718 = vmatpush2.msra.mxu0 0.0
  %719 = vmatprep.subr.mxu0 0.0
  %720 = vmatpush2.msra.mxu0 0.0
  %721 = vmatprep.mubr.f32.mxu0 0.0
  %722 = vmatmul.mubr.f32.gmra.mxu0 %v655
  %v723 = vpop.f32.mrf.mxu0
  %v724 = vadd.f32 0.0, %v723
  %v725 = vpop.f32.mrf.mxu0
  %v726 = vadd.f32 0.0, %v725
  %727 = vdwg.mxu0
  %v728 = vadd.f32 %v652, %v724
  %v729 = vadd.f32 %v653, %v726
  %v730 = vxor.u32 %v728, 2147483648
  %v731 = vmul.f32 %v730, 1.442695
  %v732 = vpow.pop %v731
  %v733 = vadd.f32 %v732, 1.0
  %v734 = vrcp.pop %v733
  %v735 = vmul.f32 1.0, %v734
  %v736 = vtanh.pop %v729
  %738 = vrot.lane.b32.xlu0 %v648, 64
  %v739 = vpop.permute.xlu0 %738
  %v741 = vmul.f32 %v735, %v739
  %742 = vrot.lane.b32.xlu0 %v606, 32
  %v743 = vpop.permute.xlu0 %742
  %v745 = vmul.f32 %v735, %v743
  %747 = vrot.lane.b32.xlu0 %v745, 96
  %v748 = vpop.permute.xlu0 %747
  %v750 = vadd.f32 %v741, %v748
  %v751 = vmul.f32 %v735, %v736
  %753 = vrot.lane.b32.xlu0 %v751, 64
  %v754 = vpop.permute.xlu0 %753
  %v756 = vadd.f32 %v750, %v754
  %v757 = vtanh.pop %v756
  %759 = vrot.lane.b32.xlu0 %v757, 96
  %v760 = vpop.permute.xlu0 %759
  %v762 = vmul.f32 %v735, %v760
  %764 = vrot.lane.b32.xlu0 %v762, 32
  %v765 = vpop.permute.xlu0 %764
  %vm767 = vcmask 785920
  %768 = vst.msk [vmem:[#allocation3] sm:$0xff] %vm767, %v765
  %769 = vst.msk [vmem:[#allocation4] sm:$0xff] %vm767, %v756
  %770 = vrot.lane.b32.xlu0 %v762, 96
  %v771 = vpop.permute.xlu0 %770
  %773 = vst.msk [vmem:[#allocation5 + $0x10] sm:$0xff] %vm223, %v771
  %v774 = vld [vmem:[%s0 + $0x70] sm:$0xff]
  %v775 = vld [vmem:[%s0 + $0x78] sm:$0xff]
  %v776 = vld [vmem:[#allocation3] sm:$0xff]
  %v777 = vld [vmem:[#allocation3 + $0x8] sm:$0xff]
  %v778 = vmul.f32 %v774, %v776
  %v779 = vmul.f32 %v775, %v777
  %v780 = vadd.f32 %v778, %v779
  %781 = vrot.lane.b32.xlu0 %v780, 64
  %v782 = vpop.permute.xlu0 %781
  %v783 = vadd.f32 %v780, %v782
  %784 = vrot.lane.b32.xlu0 %v783, 32
  %v785 = vpop.permute.xlu0 %784
  %v786 = vadd.f32 %v783, %v785
  %v787 = vld [vmem:[#allocation4] sm:$0xff]
  %v788 = vld [vmem:[#allocation4 + $0x8] sm:$0xff]
  %v789 = vmul.f32 %v774, %v787
  %v790 = vmul.f32 %v775, %v788
  %v791 = vadd.f32 %v789, %v790
  %792 = vrot.lane.b32.xlu0 %v791, 64
  %v793 = vpop.permute.xlu0 %792
  %v794 = vadd.f32 %v791, %v793
  %795 = vrot.lane.b32.xlu0 %v794, 32
  %v796 = vpop.permute.xlu0 %795
  %v797 = vadd.f32 %v794, %v796
  %v798 = vsel %vm223, %v786, %v762
  %v799 = vld [vmem:[#allocation2 + $0x30] sm:$0xff]
  %v800 = vld [vmem:[#allocation2 + $0x38] sm:$0xff]
  %v801 = vadd.f32 %v799, %v335
  %v802 = vadd.f32 %v800, %v337
  %v804 = vsel %vm363, %v798, 0
  %806 = vmatprep.subr.mxu0 0.0
  %807 = vmatpush1.msra.mxu0 0.0
  %808 = vmatprep.subr.mxu0 0.0
  %809 = vmatpush1.msra.mxu0 0.0
  %810 = vmatprep.subr.mxu0 0.0
  %811 = vmatpush1.msra.mxu0 0.0
  %812 = vmatprep.subr.mxu0 0.0
  %813 = vmatpush1.msra.mxu0 0.0
  %814 = vmatprep.subr.mxu0 0.0
  %815 = vmatpush1.msra.mxu0 0.0
  %816 = vmatprep.subr.mxu0 0.0
  %817 = vmatpush1.msra.mxu0 0.0
  %818 = vmatprep.subr.mxu0 0.0
  %819 = vmatpush1.msra.mxu0 0.0
  %820 = vmatprep.subr.mxu0 0.0
  %821 = vmatpush1.msra.mxu0 0.0
  %822 = vmatprep.subr.mxu0 %v358
  %823 = vmatpush1.msra.mxu0 %v357
  %824 = vmatprep.subr.mxu0 %v356
  %825 = vmatpush1.msra.mxu0 %v355
  %826 = vmatprep.subr.mxu0 %v354
  %827 = vmatpush1.msra.mxu0 %v353
  %828 = vmatprep.subr.mxu0 %v352
  %829 = vmatpush1.msra.mxu0 %v351
  %830 = vmatprep.subr.mxu0 %v350
  %831 = vmatpush1.msra.mxu0 %v349
  %832 = vmatprep.subr.mxu0 %v348
  %833 = vmatpush1.msra.mxu0 %v347
  %834 = vmatprep.subr.mxu0 %v346
  %835 = vmatpush1.msra.mxu0 %v345
  %836 = vmatprep.subr.mxu0 %v344
  %837 = vmatpush1.msra.mxu0 %v343
  %838 = vmatprep.subr.mxu0 0.0
  %839 = vmatpush2.msra.mxu0 0.0
  %840 = vmatprep.subr.mxu0 0.0
  %841 = vmatpush2.msra.mxu0 0.0
  %842 = vmatprep.subr.mxu0 0.0
  %843 = vmatpush2.msra.mxu0 0.0
  %844 = vmatprep.subr.mxu0 0.0
  %845 = vmatpush2.msra.mxu0 0.0
  %846 = vmatprep.subr.mxu0 0.0
  %847 = vmatpush2.msra.mxu0 0.0
  %848 = vmatprep.subr.mxu0 0.0
  %849 = vmatpush2.msra.mxu0 0.0
  %850 = vmatprep.subr.mxu0 0.0
  %851 = vmatpush2.msra.mxu0 0.0
  %852 = vmatprep.subr.mxu0 0.0
  %853 = vmatpush2.msra.mxu0 0.0
  %854 = vmatprep.subr.mxu0 0.0
  %855 = vmatpush2.msra.mxu0 0.0
  %856 = vmatprep.subr.mxu0 0.0
  %857 = vmatpush2.msra.mxu0 0.0
  %858 = vmatprep.subr.mxu0 0.0
  %859 = vmatpush2.msra.mxu0 0.0
  %860 = vmatprep.subr.mxu0 0.0
  %861 = vmatpush2.msra.mxu0 0.0
  %862 = vmatprep.subr.mxu0 0.0
  %863 = vmatpush2.msra.mxu0 0.0
  %864 = vmatprep.subr.mxu0 0.0
  %865 = vmatpush2.msra.mxu0 0.0
  %866 = vmatprep.subr.mxu0 0.0
  %867 = vmatpush2.msra.mxu0 0.0
  %868 = vmatprep.subr.mxu0 0.0
  %869 = vmatpush2.msra.mxu0 0.0
  %870 = vmatprep.mubr.f32.mxu0 0.0
  %871 = vmatmul.mubr.f32.gmra.mxu0 %v804
  %v872 = vpop.f32.mrf.mxu0
  %v873 = vadd.f32 0.0, %v872
  %v874 = vpop.f32.mrf.mxu0
  %v875 = vadd.f32 0.0, %v874
  %876 = vdwg.mxu0
  %v877 = vadd.f32 %v801, %v873
  %v878 = vadd.f32 %v802, %v875
  %v879 = vxor.u32 %v877, 2147483648
  %v880 = vmul.f32 %v879, 1.442695
  %v881 = vpow.pop %v880
  %v882 = vadd.f32 %v881, 1.0
  %v883 = vrcp.pop %v882
  %v884 = vmul.f32 1.0, %v883
  %v885 = vtanh.pop %v878
  %887 = vrot.lane.b32.xlu0 %v797, 64
  %v888 = vpop.permute.xlu0 %887
  %v890 = vmul.f32 %v884, %v888
  %892 = vrot.lane.b32.xlu0 %v756, 32
  %v893 = vpop.permute.xlu0 %892
  %v895 = vmul.f32 %v884, %v893
  %897 = vrot.lane.b32.xlu0 %v895, 96
  %v898 = vpop.permute.xlu0 %897
  %v900 = vadd.f32 %v890, %v898
  %v901 = vmul.f32 %v884, %v885
  %903 = vrot.lane.b32.xlu0 %v901, 64
  %v904 = vpop.permute.xlu0 %903
  %v906 = vadd.f32 %v900, %v904
  %v907 = vtanh.pop %v906
  %909 = vrot.lane.b32.xlu0 %v907, 96
  %v910 = vpop.permute.xlu0 %909
  %v912 = vmul.f32 %v884, %v910
  %914 = vrot.lane.b32.xlu0 %v912, 64
  %v915 = vpop.permute.xlu0 %914
  %vm917 = vcmask 1048320
  %918 = vst.msk [vmem:[#allocation3] sm:$0xff] %vm917, %v915
  %920 = vrot.lane.b32.xlu0 %v906, 32
  %v921 = vpop.permute.xlu0 %920
  %923 = vst.msk [vmem:[#allocation4] sm:$0xff] %vm917, %v921
  %924 = vrot.lane.b32.xlu0 %v912, 96
  %v925 = vpop.permute.xlu0 %924
  %927 = vst.msk [vmem:[#allocation5 + $0x18] sm:$0xff] %vm223, %v925
  %v928 = vld [vmem:[%s0 + $0x90] sm:$0xff]
  %v929 = vld [vmem:[%s0 + $0x98] sm:$0xff]
  %v930 = vld [vmem:[#allocation3] sm:$0xff]
  %v931 = vld [vmem:[#allocation3 + $0x8] sm:$0xff]
  %v932 = vmul.f32 %v928, %v930
  %v933 = vmul.f32 %v929, %v931
  %v934 = vadd.f32 %v932, %v933
  %935 = vrot.lane.b32.xlu0 %v934, 64
  %v936 = vpop.permute.xlu0 %935
  %v937 = vadd.f32 %v934, %v936
  %938 = vrot.lane.b32.xlu0 %v937, 32
  %v939 = vpop.permute.xlu0 %938
  %v940 = vadd.f32 %v937, %v939
  %v941 = vld [vmem:[#allocation4] sm:$0xff]
  %v942 = vld [vmem:[#allocation4 + $0x8] sm:$0xff]
  %v943 = vmul.f32 %v928, %v941
  %v944 = vmul.f32 %v929, %v942
  %v945 = vadd.f32 %v943, %v944
  %946 = vrot.lane.b32.xlu0 %v945, 64
  %v947 = vpop.permute.xlu0 %946
  %v948 = vadd.f32 %v945, %v947
  %949 = vrot.lane.b32.xlu0 %v948, 32
  %v950 = vpop.permute.xlu0 %949
  %v951 = vadd.f32 %v948, %v950
  %v952 = vsel %vm223, %v940, 0.0
  %v953 = vld [vmem:[#allocation2 + $0x40] sm:$0xff]
  %v954 = vld [vmem:[#allocation2 + $0x48] sm:$0xff]
  %v955 = vadd.f32 %v953, %v335
  %v956 = vadd.f32 %v954, %v337
  %v958 = vsel %vm363, %v952, 0
  %960 = vmatprep.subr.mxu0 0.0
  %961 = vmatpush1.msra.mxu0 0.0
  %962 = vmatprep.subr.mxu0 0.0
  %963 = vmatpush1.msra.mxu0 0.0
  %964 = vmatprep.subr.mxu0 0.0
  %965 = vmatpush1.msra.mxu0 0.0
  %966 = vmatprep.subr.mxu0 0.0
  %967 = vmatpush1.msra.mxu0 0.0
  %968 = vmatprep.subr.mxu0 0.0
  %969 = vmatpush1.msra.mxu0 0.0
  %970 = vmatprep.subr.mxu0 0.0
  %971 = vmatpush1.msra.mxu0 0.0
  %972 = vmatprep.subr.mxu0 0.0
  %973 = vmatpush1.msra.mxu0 0.0
  %974 = vmatprep.subr.mxu0 0.0
  %975 = vmatpush1.msra.mxu0 0.0
  %976 = vmatprep.subr.mxu0 %v358
  %977 = vmatpush1.msra.mxu0 %v357
  %978 = vmatprep.subr.mxu0 %v356
  %979 = vmatpush1.msra.mxu0 %v355
  %980 = vmatprep.subr.mxu0 %v354
  %981 = vmatpush1.msra.mxu0 %v353
  %982 = vmatprep.subr.mxu0 %v352
  %983 = vmatpush1.msra.mxu0 %v351
  %984 = vmatprep.subr.mxu0 %v350
  %985 = vmatpush1.msra.mxu0 %v349
  %986 = vmatprep.subr.mxu0 %v348
  %987 = vmatpush1.msra.mxu0 %v347
  %988 = vmatprep.subr.mxu0 %v346
  %989 = vmatpush1.msra.mxu0 %v345
  %990 = vmatprep.subr.mxu0 %v344
  %991 = vmatpush1.msra.mxu0 %v343
  %992 = vmatprep.subr.mxu0 0.0
  %993 = vmatpush2.msra.mxu0 0.0
  %994 = vmatprep.subr.mxu0 0.0
  %995 = vmatpush2.msra.mxu0 0.0
  %996 = vmatprep.subr.mxu0 0.0
  %997 = vmatpush2.msra.mxu0 0.0
  %998 = vmatprep.subr.mxu0 0.0
  %999 = vmatpush2.msra.mxu0 0.0
  %1000 = vmatprep.subr.mxu0 0.0
  %1001 = vmatpush2.msra.mxu0 0.0
  %1002 = vmatprep.subr.mxu0 0.0
  %1003 = vmatpush2.msra.mxu0 0.0
  %1004 = vmatprep.subr.mxu0 0.0
  %1005 = vmatpush2.msra.mxu0 0.0
  %1006 = vmatprep.subr.mxu0 0.0
  %1007 = vmatpush2.msra.mxu0 0.0
  %1008 = vmatprep.subr.mxu0 0.0
  %1009 = vmatpush2.msra.mxu0 0.0
  %1010 = vmatprep.subr.mxu0 0.0
  %1011 = vmatpush2.msra.mxu0 0.0
  %1012 = vmatprep.subr.mxu0 0.0
  %1013 = vmatpush2.msra.mxu0 0.0
  %1014 = vmatprep.subr.mxu0 0.0
  %1015 = vmatpush2.msra.mxu0 0.0
  %1016 = vmatprep.subr.mxu0 0.0
  %1017 = vmatpush2.msra.mxu0 0.0
  %1018 = vmatprep.subr.mxu0 0.0
  %1019 = vmatpush2.msra.mxu0 0.0
  %1020 = vmatprep.subr.mxu0 0.0
  %1021 = vmatpush2.msra.mxu0 0.0
  %1022 = vmatprep.subr.mxu0 0.0
  %1023 = vmatpush2.msra.mxu0 0.0
  %1024 = vmatprep.mubr.f32.mxu0 0.0
  %1025 = vmatmul.mubr.f32.gmra.mxu0 %v958
  %v1026 = vpop.f32.mrf.mxu0
  %v1027 = vadd.f32 0.0, %v1026
  %v1028 = vpop.f32.mrf.mxu0
  %v1029 = vadd.f32 0.0, %v1028
  %1030 = vdwg.mxu0
  %v1031 = vadd.f32 %v955, %v1027
  %v1032 = vadd.f32 %v956, %v1029
  %v1033 = vxor.u32 %v1031, 2147483648
  %v1034 = vmul.f32 %v1033, 1.442695
  %v1035 = vpow.pop %v1034
  %v1036 = vadd.f32 %v1035, 1.0
  %v1037 = vrcp.pop %v1036
  %v1038 = vmul.f32 1.0, %v1037
  %v1039 = vtanh.pop %v1032
  %1041 = vrot.lane.b32.xlu0 %v951, 64
  %v1042 = vpop.permute.xlu0 %1041
  %v1044 = vmul.f32 %v1038, %v1042
  %v1045 = vmul.f32 %v1038, 0.0
  %1047 = vrot.lane.b32.xlu0 %v1045, 96
  %v1048 = vpop.permute.xlu0 %1047
  %v1050 = vadd.f32 %v1044, %v1048
  %v1051 = vmul.f32 %v1038, %v1039
  %1053 = vrot.lane.b32.xlu0 %v1051, 64
  %v1054 = vpop.permute.xlu0 %1053
  %v1056 = vadd.f32 %v1050, %v1054
  %v1057 = vtanh.pop %v1056
  %1059 = vrot.lane.b32.xlu0 %v1057, 96
  %v1060 = vpop.permute.xlu0 %1059
  %v1062 = vmul.f32 %v1038, %v1060
  %1064 = vrot.lane.b32.xlu0 %v1062, 96
  %v1065 = vpop.permute.xlu0 %1064
  %1067 = vst.msk [vmem:[#allocation3 + $0x8] sm:$0xff] %vm223, %v1065
  %1069 = vrot.lane.b32.xlu0 %v1056, 64
  %v1070 = vpop.permute.xlu0 %1069
  %1072 = vst.msk [vmem:[#allocation4 + $0x8] sm:$0xff] %vm223, %v1070
  %1073 = vst.msk [vmem:[#allocation5 + $0x20] sm:$0xff] %vm223, %v1065
  %v1074 = vld [vmem:[%s0 + $0xb0] sm:$0xff]
  %v1075 = vld [vmem:[%s0 + $0xb8] sm:$0xff]
  %v1076 = vld [vmem:[#allocation3] sm:$0xff]
  %v1077 = vld [vmem:[#allocation3 + $0x8] sm:$0xff]
  %v1078 = vmul.f32 %v1074, %v1076
  %v1079 = vmul.f32 %v1075, %v1077
  %v1080 = vadd.f32 %v1078, %v1079
  %1081 = vrot.lane.b32.xlu0 %v1080, 64
  %v1082 = vpop.permute.xlu0 %1081
  %v1083 = vadd.f32 %v1080, %v1082
  %1084 = vrot.lane.b32.xlu0 %v1083, 32
  %v1085 = vpop.permute.xlu0 %1084
  %v1086 = vadd.f32 %v1083, %v1085
  %v1087 = vld [vmem:[#allocation4] sm:$0xff]
  %v1088 = vld [vmem:[#allocation4 + $0x8] sm:$0xff]
  %v1089 = vmul.f32 %v1074, %v1087
  %v1090 = vmul.f32 %v1075, %v1088
  %v1091 = vadd.f32 %v1089, %v1090
  %1092 = vrot.lane.b32.xlu0 %v1091, 64
  %v1093 = vpop.permute.xlu0 %1092
  %v1094 = vadd.f32 %v1091, %v1093
  %1095 = vrot.lane.b32.xlu0 %v1094, 32
  %v1096 = vpop.permute.xlu0 %1095
  %v1097 = vadd.f32 %v1094, %v1096
  %v1098 = vsel %vm223, %v1086, %v1062
  %v1099 = vld [vmem:[#allocation2 + $0x50] sm:$0xff]
  %v1100 = vld [vmem:[#allocation2 + $0x58] sm:$0xff]
  %v1101 = vadd.f32 %v1099, %v335
  %v1102 = vadd.f32 %v1100, %v337
  %v1104 = vsel %vm363, %v1098, 0
  %1106 = vmatprep.subr.mxu0 0.0
  %1107 = vmatpush1.msra.mxu0 0.0
  %1108 = vmatprep.subr.mxu0 0.0
  %1109 = vmatpush1.msra.mxu0 0.0
  %1110 = vmatprep.subr.mxu0 0.0
  %1111 = vmatpush1.msra.mxu0 0.0
  %1112 = vmatprep.subr.mxu0 0.0
  %1113 = vmatpush1.msra.mxu0 0.0
  %1114 = vmatprep.subr.mxu0 0.0
  %1115 = vmatpush1.msra.mxu0 0.0
  %1116 = vmatprep.subr.mxu0 0.0
  %1117 = vmatpush1.msra.mxu0 0.0
  %1118 = vmatprep.subr.mxu0 0.0
  %1119 = vmatpush1.msra.mxu0 0.0
  %1120 = vmatprep.subr.mxu0 0.0
  %1121 = vmatpush1.msra.mxu0 0.0
  %1122 = vmatprep.subr.mxu0 %v358
  %1123 = vmatpush1.msra.mxu0 %v357
  %1124 = vmatprep.subr.mxu0 %v356
  %1125 = vmatpush1.msra.mxu0 %v355
  %1126 = vmatprep.subr.mxu0 %v354
  %1127 = vmatpush1.msra.mxu0 %v353
  %1128 = vmatprep.subr.mxu0 %v352
  %1129 = vmatpush1.msra.mxu0 %v351
  %1130 = vmatprep.subr.mxu0 %v350
  %1131 = vmatpush1.msra.mxu0 %v349
  %1132 = vmatprep.subr.mxu0 %v348
  %1133 = vmatpush1.msra.mxu0 %v347
  %1134 = vmatprep.subr.mxu0 %v346
  %1135 = vmatpush1.msra.mxu0 %v345
  %1136 = vmatprep.subr.mxu0 %v344
  %1137 = vmatpush1.msra.mxu0 %v343
  %1138 = vmatprep.subr.mxu0 0.0
  %1139 = vmatpush2.msra.mxu0 0.0
  %1140 = vmatprep.subr.mxu0 0.0
  %1141 = vmatpush2.msra.mxu0 0.0
  %1142 = vmatprep.subr.mxu0 0.0
  %1143 = vmatpush2.msra.mxu0 0.0
  %1144 = vmatprep.subr.mxu0 0.0
  %1145 = vmatpush2.msra.mxu0 0.0
  %1146 = vmatprep.subr.mxu0 0.0
  %1147 = vmatpush2.msra.mxu0 0.0
  %1148 = vmatprep.subr.mxu0 0.0
  %1149 = vmatpush2.msra.mxu0 0.0
  %1150 = vmatprep.subr.mxu0 0.0
  %1151 = vmatpush2.msra.mxu0 0.0
  %1152 = vmatprep.subr.mxu0 0.0
  %1153 = vmatpush2.msra.mxu0 0.0
  %1154 = vmatprep.subr.mxu0 0.0
  %1155 = vmatpush2.msra.mxu0 0.0
  %1156 = vmatprep.subr.mxu0 0.0
  %1157 = vmatpush2.msra.mxu0 0.0
  %1158 = vmatprep.subr.mxu0 0.0
  %1159 = vmatpush2.msra.mxu0 0.0
  %1160 = vmatprep.subr.mxu0 0.0
  %1161 = vmatpush2.msra.mxu0 0.0
  %1162 = vmatprep.subr.mxu0 0.0
  %1163 = vmatpush2.msra.mxu0 0.0
  %1164 = vmatprep.subr.mxu0 0.0
  %1165 = vmatpush2.msra.mxu0 0.0
  %1166 = vmatprep.subr.mxu0 0.0
  %1167 = vmatpush2.msra.mxu0 0.0
  %1168 = vmatprep.subr.mxu0 0.0
  %1169 = vmatpush2.msra.mxu0 0.0
  %1170 = vmatprep.mubr.f32.mxu0 0.0
  %1171 = vmatmul.mubr.f32.gmra.mxu0 %v1104
  %v1172 = vpop.f32.mrf.mxu0
  %v1173 = vadd.f32 0.0, %v1172
  %v1174 = vpop.f32.mrf.mxu0
  %v1175 = vadd.f32 0.0, %v1174
  %1176 = vdwg.mxu0
  %v1177 = vadd.f32 %v1101, %v1173
  %v1178 = vadd.f32 %v1102, %v1175
  %v1179 = vxor.u32 %v1177, 2147483648
  %v1180 = vmul.f32 %v1179, 1.442695
  %v1181 = vpow.pop %v1180
  %v1182 = vadd.f32 %v1181, 1.0
  %v1183 = vrcp.pop %v1182
  %v1184 = vmul.f32 1.0, %v1183
  %v1185 = vtanh.pop %v1178
  %1187 = vrot.lane.b32.xlu0 %v1097, 64
  %v1188 = vpop.permute.xlu0 %1187
  %v1190 = vmul.f32 %v1184, %v1188
  %1191 = vrot.lane.b32.xlu0 %v1056, 32
  %v1192 = vpop.permute.xlu0 %1191
  %v1194 = vmul.f32 %v1184, %v1192
  %1196 = vrot.lane.b32.xlu0 %v1194, 96
  %v1197 = vpop.permute.xlu0 %1196
  %v1199 = vadd.f32 %v1190, %v1197
  %v1200 = vmul.f32 %v1184, %v1185
  %1202 = vrot.lane.b32.xlu0 %v1200, 64
  %v1203 = vpop.permute.xlu0 %1202
  %v1205 = vadd.f32 %v1199, %v1203
  %v1206 = vtanh.pop %v1205
  %1208 = vrot.lane.b32.xlu0 %v1206, 96
  %v1209 = vpop.permute.xlu0 %1208
  %v1211 = vmul.f32 %v1184, %v1209
  %1212 = vst.msk [vmem:[#allocation3 + $0x8] sm:$0xff] %vm613, %v1211
  %1214 = vrot.lane.b32.xlu0 %v1205, 96
  %v1215 = vpop.permute.xlu0 %1214
  %1217 = vst.msk [vmem:[#allocation4 + $0x8] sm:$0xff] %vm613, %v1215
  %1219 = vrot.lane.b32.xlu0 %v1211, 96
  %v1220 = vpop.permute.xlu0 %1219
  %1222 = vst.msk [vmem:[#allocation5 + $0x28] sm:$0xff] %vm223, %v1220
  %v1223 = vld [vmem:[%s0 + $0xd0] sm:$0xff]
  %v1224 = vld [vmem:[%s0 + $0xd8] sm:$0xff]
  %v1225 = vld [vmem:[#allocation3] sm:$0xff]
  %v1226 = vld [vmem:[#allocation3 + $0x8] sm:$0xff]
  %v1227 = vmul.f32 %v1223, %v1225
  %v1228 = vmul.f32 %v1224, %v1226
  %v1229 = vadd.f32 %v1227, %v1228
  %1230 = vrot.lane.b32.xlu0 %v1229, 64
  %v1231 = vpop.permute.xlu0 %1230
  %v1232 = vadd.f32 %v1229, %v1231
  %1233 = vrot.lane.b32.xlu0 %v1232, 32
  %v1234 = vpop.permute.xlu0 %1233
  %v1235 = vadd.f32 %v1232, %v1234
  %v1236 = vld [vmem:[#allocation4] sm:$0xff]
  %v1237 = vld [vmem:[#allocation4 + $0x8] sm:$0xff]
  %v1238 = vmul.f32 %v1223, %v1236
  %v1239 = vmul.f32 %v1224, %v1237
  %v1240 = vadd.f32 %v1238, %v1239
  %1241 = vrot.lane.b32.xlu0 %v1240, 64
  %v1242 = vpop.permute.xlu0 %1241
  %v1243 = vadd.f32 %v1240, %v1242
  %1244 = vrot.lane.b32.xlu0 %v1243, 32
  %v1245 = vpop.permute.xlu0 %1244
  %v1246 = vadd.f32 %v1243, %v1245
  %v1247 = vsel %vm223, %v1235, %v1211
  %v1248 = vld [vmem:[#allocation2 + $0x60] sm:$0xff]
  %v1249 = vld [vmem:[#allocation2 + $0x68] sm:$0xff]
  %v1250 = vadd.f32 %v1248, %v335
  %v1251 = vadd.f32 %v1249, %v337
  %v1253 = vsel %vm363, %v1247, 0
  %1255 = vmatprep.subr.mxu0 0.0
  %1256 = vmatpush1.msra.mxu0 0.0
  %1257 = vmatprep.subr.mxu0 0.0
  %1258 = vmatpush1.msra.mxu0 0.0
  %1259 = vmatprep.subr.mxu0 0.0
  %1260 = vmatpush1.msra.mxu0 0.0
  %1261 = vmatprep.subr.mxu0 0.0
  %1262 = vmatpush1.msra.mxu0 0.0
  %1263 = vmatprep.subr.mxu0 0.0
  %1264 = vmatpush1.msra.mxu0 0.0
  %1265 = vmatprep.subr.mxu0 0.0
  %1266 = vmatpush1.msra.mxu0 0.0
  %1267 = vmatprep.subr.mxu0 0.0
  %1268 = vmatpush1.msra.mxu0 0.0
  %1269 = vmatprep.subr.mxu0 0.0
  %1270 = vmatpush1.msra.mxu0 0.0
  %1271 = vmatprep.subr.mxu0 %v358
  %1272 = vmatpush1.msra.mxu0 %v357
  %1273 = vmatprep.subr.mxu0 %v356
  %1274 = vmatpush1.msra.mxu0 %v355
  %1275 = vmatprep.subr.mxu0 %v354
  %1276 = vmatpush1.msra.mxu0 %v353
  %1277 = vmatprep.subr.mxu0 %v352
  %1278 = vmatpush1.msra.mxu0 %v351
  %1279 = vmatprep.subr.mxu0 %v350
  %1280 = vmatpush1.msra.mxu0 %v349
  %1281 = vmatprep.subr.mxu0 %v348
  %1282 = vmatpush1.msra.mxu0 %v347
  %1283 = vmatprep.subr.mxu0 %v346
  %1284 = vmatpush1.msra.mxu0 %v345
  %1285 = vmatprep.subr.mxu0 %v344
  %1286 = vmatpush1.msra.mxu0 %v343
  %1287 = vmatprep.subr.mxu0 0.0
  %1288 = vmatpush2.msra.mxu0 0.0
  %1289 = vmatprep.subr.mxu0 0.0
  %1290 = vmatpush2.msra.mxu0 0.0
  %1291 = vmatprep.subr.mxu0 0.0
  %1292 = vmatpush2.msra.mxu0 0.0
  %1293 = vmatprep.subr.mxu0 0.0
  %1294 = vmatpush2.msra.mxu0 0.0
  %1295 = vmatprep.subr.mxu0 0.0
  %1296 = vmatpush2.msra.mxu0 0.0
  %1297 = vmatprep.subr.mxu0 0.0
  %1298 = vmatpush2.msra.mxu0 0.0
  %1299 = vmatprep.subr.mxu0 0.0
  %1300 = vmatpush2.msra.mxu0 0.0
  %1301 = vmatprep.subr.mxu0 0.0
  %1302 = vmatpush2.msra.mxu0 0.0
  %1303 = vmatprep.subr.mxu0 0.0
  %1304 = vmatpush2.msra.mxu0 0.0
  %1305 = vmatprep.subr.mxu0 0.0
  %1306 = vmatpush2.msra.mxu0 0.0
  %1307 = vmatprep.subr.mxu0 0.0
  %1308 = vmatpush2.msra.mxu0 0.0
  %1309 = vmatprep.subr.mxu0 0.0
  %1310 = vmatpush2.msra.mxu0 0.0
  %1311 = vmatprep.subr.mxu0 0.0
  %1312 = vmatpush2.msra.mxu0 0.0
  %1313 = vmatprep.subr.mxu0 0.0
  %1314 = vmatpush2.msra.mxu0 0.0
  %1315 = vmatprep.subr.mxu0 0.0
  %1316 = vmatpush2.msra.mxu0 0.0
  %1317 = vmatprep.subr.mxu0 0.0
  %1318 = vmatpush2.msra.mxu0 0.0
  %1319 = vmatprep.mubr.f32.mxu0 0.0
  %1320 = vmatmul.mubr.f32.gmra.mxu0 %v1253
  %v1321 = vpop.f32.mrf.mxu0
  %v1322 = vadd.f32 0.0, %v1321
  %v1323 = vpop.f32.mrf.mxu0
  %v1324 = vadd.f32 0.0, %v1323
  %1325 = vdwg.mxu0
  %v1326 = vadd.f32 %v1250, %v1322
  %v1327 = vadd.f32 %v1251, %v1324
  %v1328 = vxor.u32 %v1326, 2147483648
  %v1329 = vmul.f32 %v1328, 1.442695
  %v1330 = vpow.pop %v1329
  %v1331 = vadd.f32 %v1330, 1.0
  %v1332 = vrcp.pop %v1331
  %v1333 = vmul.f32 1.0, %v1332
  %v1334 = vtanh.pop %v1327
  %1336 = vrot.lane.b32.xlu0 %v1246, 64
  %v1337 = vpop.permute.xlu0 %1336
  %v1339 = vmul.f32 %v1333, %v1337
  %1340 = vrot.lane.b32.xlu0 %v1205, 32
  %v1341 = vpop.permute.xlu0 %1340
  %v1343 = vmul.f32 %v1333, %v1341
  %1345 = vrot.lane.b32.xlu0 %v1343, 96
  %v1346 = vpop.permute.xlu0 %1345
  %v1348 = vadd.f32 %v1339, %v1346
  %v1349 = vmul.f32 %v1333, %v1334
  %1351 = vrot.lane.b32.xlu0 %v1349, 64
  %v1352 = vpop.permute.xlu0 %1351
  %v1354 = vadd.f32 %v1348, %v1352
  %v1355 = vtanh.pop %v1354
  %1357 = vrot.lane.b32.xlu0 %v1355, 96
  %v1358 = vpop.permute.xlu0 %1357
  %v1360 = vmul.f32 %v1333, %v1358
  %1362 = vrot.lane.b32.xlu0 %v1360, 32
  %v1363 = vpop.permute.xlu0 %1362
  %1365 = vst.msk [vmem:[#allocation3 + $0x8] sm:$0xff] %vm767, %v1363
  %1366 = vst.msk [vmem:[#allocation4 + $0x8] sm:$0xff] %vm767, %v1354
  %1367 = vrot.lane.b32.xlu0 %v1360, 96
  %v1368 = vpop.permute.xlu0 %1367
  %1370 = vst.msk [vmem:[#allocation5 + $0x30] sm:$0xff] %vm223, %v1368
  %v1371 = vld [vmem:[%s0 + $0xf0] sm:$0xff]
  %v1372 = vld [vmem:[%s0 + $0xf8] sm:$0xff]
  %v1373 = vld [vmem:[#allocation3] sm:$0xff]
  %v1374 = vld [vmem:[#allocation3 + $0x8] sm:$0xff]
  %v1375 = vmul.f32 %v1371, %v1373
  %v1376 = vmul.f32 %v1372, %v1374
  %v1377 = vadd.f32 %v1375, %v1376
  %1378 = vrot.lane.b32.xlu0 %v1377, 64
  %v1379 = vpop.permute.xlu0 %1378
  %v1380 = vadd.f32 %v1377, %v1379
  %1381 = vrot.lane.b32.xlu0 %v1380, 32
  %v1382 = vpop.permute.xlu0 %1381
  %v1383 = vadd.f32 %v1380, %v1382
  %v1384 = vld [vmem:[#allocation4] sm:$0xff]
  %v1385 = vld [vmem:[#allocation4 + $0x8] sm:$0xff]
  %v1386 = vmul.f32 %v1371, %v1384
  %v1387 = vmul.f32 %v1372, %v1385
  %v1388 = vadd.f32 %v1386, %v1387
  %1389 = vrot.lane.b32.xlu0 %v1388, 64
  %v1390 = vpop.permute.xlu0 %1389
  %v1391 = vadd.f32 %v1388, %v1390
  %1392 = vrot.lane.b32.xlu0 %v1391, 32
  %v1393 = vpop.permute.xlu0 %1392
  %v1394 = vadd.f32 %v1391, %v1393
  %v1395 = vsel %vm223, %v1383, 0.0
  %v1396 = vld [vmem:[#allocation2 + $0x70] sm:$0xff]
  %v1397 = vld [vmem:[#allocation2 + $0x78] sm:$0xff]
  %v1398 = vadd.f32 %v1396, %v335
  %v1399 = vadd.f32 %v1397, %v337
  %v1401 = vsel %vm363, %v1395, 0
  %1403 = vmatprep.subr.mxu0 0.0
  %1404 = vmatpush1.msra.mxu0 0.0
  %1405 = vmatprep.subr.mxu0 0.0
  %1406 = vmatpush1.msra.mxu0 0.0
  %1407 = vmatprep.subr.mxu0 0.0
  %1408 = vmatpush1.msra.mxu0 0.0
  %1409 = vmatprep.subr.mxu0 0.0
  %1410 = vmatpush1.msra.mxu0 0.0
  %1411 = vmatprep.subr.mxu0 0.0
  %1412 = vmatpush1.msra.mxu0 0.0
  %1413 = vmatprep.subr.mxu0 0.0
  %1414 = vmatpush1.msra.mxu0 0.0
  %1415 = vmatprep.subr.mxu0 0.0
  %1416 = vmatpush1.msra.mxu0 0.0
  %1417 = vmatprep.subr.mxu0 0.0
  %1418 = vmatpush1.msra.mxu0 0.0
  %1419 = vmatprep.subr.mxu0 %v358
  %1420 = vmatpush1.msra.mxu0 %v357
  %1421 = vmatprep.subr.mxu0 %v356
  %1422 = vmatpush1.msra.mxu0 %v355
  %1423 = vmatprep.subr.mxu0 %v354
  %1424 = vmatpush1.msra.mxu0 %v353
  %1425 = vmatprep.subr.mxu0 %v352
  %1426 = vmatpush1.msra.mxu0 %v351
  %1427 = vmatprep.subr.mxu0 %v350
  %1428 = vmatpush1.msra.mxu0 %v349
  %1429 = vmatprep.subr.mxu0 %v348
  %1430 = vmatpush1.msra.mxu0 %v347
  %1431 = vmatprep.subr.mxu0 %v346
  %1432 = vmatpush1.msra.mxu0 %v345
  %1433 = vmatprep.subr.mxu0 %v344
  %1434 = vmatpush1.msra.mxu0 %v343
  %1435 = vmatprep.subr.mxu0 0.0
  %1436 = vmatpush2.msra.mxu0 0.0
  %1437 = vmatprep.subr.mxu0 0.0
  %1438 = vmatpush2.msra.mxu0 0.0
  %1439 = vmatprep.subr.mxu0 0.0
  %1440 = vmatpush2.msra.mxu0 0.0
  %1441 = vmatprep.subr.mxu0 0.0
  %1442 = vmatpush2.msra.mxu0 0.0
  %1443 = vmatprep.subr.mxu0 0.0
  %1444 = vmatpush2.msra.mxu0 0.0
  %1445 = vmatprep.subr.mxu0 0.0
  %1446 = vmatpush2.msra.mxu0 0.0
  %1447 = vmatprep.subr.mxu0 0.0
  %1448 = vmatpush2.msra.mxu0 0.0
  %1449 = vmatprep.subr.mxu0 0.0
  %1450 = vmatpush2.msra.mxu0 0.0
  %1451 = vmatprep.subr.mxu0 0.0
  %1452 = vmatpush2.msra.mxu0 0.0
  %1453 = vmatprep.subr.mxu0 0.0
  %1454 = vmatpush2.msra.mxu0 0.0
  %1455 = vmatprep.subr.mxu0 0.0
  %1456 = vmatpush2.msra.mxu0 0.0
  %1457 = vmatprep.subr.mxu0 0.0
  %1458 = vmatpush2.msra.mxu0 0.0
  %1459 = vmatprep.subr.mxu0 0.0
  %1460 = vmatpush2.msra.mxu0 0.0
  %1461 = vmatprep.subr.mxu0 0.0
  %1462 = vmatpush2.msra.mxu0 0.0
  %1463 = vmatprep.subr.mxu0 0.0
  %1464 = vmatpush2.msra.mxu0 0.0
  %1465 = vmatprep.subr.mxu0 0.0
  %1466 = vmatpush2.msra.mxu0 0.0
  %1467 = vmatprep.mubr.f32.mxu0 0.0
  %1468 = vmatmul.mubr.f32.gmra.mxu0 %v1401
  %v1469 = vpop.f32.mrf.mxu0
  %v1470 = vadd.f32 0.0, %v1469
  %v1471 = vpop.f32.mrf.mxu0
  %v1472 = vadd.f32 0.0, %v1471
  %1473 = vdwg.mxu0
  %v1474 = vadd.f32 %v1398, %v1470
  %v1475 = vadd.f32 %v1399, %v1472
  %v1476 = vxor.u32 %v1474, 2147483648
  %v1477 = vmul.f32 %v1476, 1.442695
  %v1478 = vpow.pop %v1477
  %v1479 = vadd.f32 %v1478, 1.0
  %v1480 = vrcp.pop %v1479
  %v1481 = vmul.f32 1.0, %v1480
  %v1482 = vtanh.pop %v1475
  %1484 = vrot.lane.b32.xlu0 %v1394, 64
  %v1485 = vpop.permute.xlu0 %1484
  %v1487 = vmul.f32 %v1481, %v1485
  %v1488 = vmul.f32 %v1481, 0.0
  %1490 = vrot.lane.b32.xlu0 %v1488, 96
  %v1491 = vpop.permute.xlu0 %1490
  %v1493 = vadd.f32 %v1487, %v1491
  %v1494 = vmul.f32 %v1481, %v1482
  %1496 = vrot.lane.b32.xlu0 %v1494, 64
  %v1497 = vpop.permute.xlu0 %1496
  %v1499 = vadd.f32 %v1493, %v1497
  %v1500 = vtanh.pop %v1499
  %1502 = vrot.lane.b32.xlu0 %v1500, 96
  %v1503 = vpop.permute.xlu0 %1502
  %v1505 = vmul.f32 %v1481, %v1503
  %1507 = vrot.lane.b32.xlu0 %v1505, 64
  %v1508 = vpop.permute.xlu0 %1507
  %1510 = vst.msk [vmem:[#allocation3 + $0x8] sm:$0xff] %vm917, %v1508
  %1512 = vrot.lane.b32.xlu0 %v1499, 32
  %v1513 = vpop.permute.xlu0 %1512
  %1515 = vst.msk [vmem:[#allocation4 + $0x8] sm:$0xff] %vm917, %v1513
  %1516 = vrot.lane.b32.xlu0 %v1505, 96
  %v1517 = vpop.permute.xlu0 %1516
  %1519 = vst.msk [vmem:[#allocation5 + $0x38] sm:$0xff] %vm223, %v1517
  %v1520 = vld [vmem:[#allocation5] sm:$0xff]
  %v1521 = vld [vmem:[#allocation5 + $0x8] sm:$0xff]
  %v1522 = vld [vmem:[#allocation5 + $0x10] sm:$0xff]
  %v1523 = vld [vmem:[#allocation5 + $0x18] sm:$0xff]
  %v1524 = vld [vmem:[#allocation5 + $0x20] sm:$0xff]
  %v1525 = vld [vmem:[#allocation5 + $0x28] sm:$0xff]
  %v1526 = vld [vmem:[#allocation5 + $0x30] sm:$0xff]
  %v1527 = vld [vmem:[#allocation5 + $0x38] sm:$0xff]
  %v1528 = vld [vmem:[%s6] sm:$0xff]
  %v1529 = vld [vmem:[%s6 + $0x8] sm:$0xff]
  %v1530 = vld [vmem:[%s6 + $0x10] sm:$0xff]
  %v1531 = vld [vmem:[%s6 + $0x18] sm:$0xff]
  %v1532 = vld [vmem:[%s7] sm:$0x1]
  %v1534 = vlaneseq
  %v1535 = vshrl.u32 %v1534, 7
  %v1536 = vsub.s32 0, %v1535
  %v1537 = vrot.slane %v1532, %v1536
  %v1540 = vsel %vm223, %v1520, 0
  %v1543 = vsel %vm223, %v1521, 0
  %v1546 = vsel %vm223, %v1522, 0
  %v1549 = vsel %vm223, %v1523, 0
  %v1552 = vsel %vm223, %v1524, 0
  %v1555 = vsel %vm223, %v1525, 0
  %v1558 = vsel %vm223, %v1526, 0
  %v1561 = vsel %vm223, %v1527, 0
  %1563 = vmatprep.subr.mxu0 0.0
  %1564 = vmatpush1.msra.mxu0 0.0
  %1565 = vmatprep.subr.mxu0 0.0
  %1566 = vmatpush1.msra.mxu0 0.0
  %1567 = vmatprep.subr.mxu0 0.0
  %1568 = vmatpush1.msra.mxu0 0.0
  %1569 = vmatprep.subr.mxu0 0.0
  %1570 = vmatpush1.msra.mxu0 0.0
  %1571 = vmatprep.subr.mxu0 0.0
  %1572 = vmatpush1.msra.mxu0 0.0
  %1573 = vmatprep.subr.mxu0 0.0
  %1574 = vmatpush1.msra.mxu0 0.0
  %1575 = vmatprep.subr.mxu0 0.0
  %1576 = vmatpush1.msra.mxu0 0.0
  %1577 = vmatprep.subr.mxu0 0.0
  %1578 = vmatpush1.msra.mxu0 0.0
  %1579 = vmatprep.subr.mxu0 0.0
  %1580 = vmatpush1.msra.mxu0 0.0
  %1581 = vmatprep.subr.mxu0 0.0
  %1582 = vmatpush1.msra.mxu0 0.0
  %1583 = vmatprep.subr.mxu0 0.0
  %1584 = vmatpush1.msra.mxu0 0.0
  %1585 = vmatprep.subr.mxu0 0.0
  %1586 = vmatpush1.msra.mxu0 0.0
  %1587 = vmatprep.subr.mxu0 0.0
  %1588 = vmatpush1.msra.mxu0 %v1531
  %1589 = vmatprep.subr.mxu0 0.0
  %1590 = vmatpush1.msra.mxu0 %v1530
  %1591 = vmatprep.subr.mxu0 0.0
  %1592 = vmatpush1.msra.mxu0 %v1529
  %1593 = vmatprep.subr.mxu0 0.0
  %1594 = vmatpush1.msra.mxu0 %v1528
  %1595 = vmatprep.subr.mxu0 0.0
  %1596 = vmatpush2.msra.mxu0 0.0
  %1597 = vmatprep.subr.mxu0 0.0
  %1598 = vmatpush2.msra.mxu0 0.0
  %1599 = vmatprep.subr.mxu0 0.0
  %1600 = vmatpush2.msra.mxu0 0.0
  %1601 = vmatprep.subr.mxu0 0.0
  %1602 = vmatpush2.msra.mxu0 0.0
  %1603 = vmatprep.subr.mxu0 0.0
  %1604 = vmatpush2.msra.mxu0 0.0
  %1605 = vmatprep.subr.mxu0 0.0
  %1606 = vmatpush2.msra.mxu0 0.0
  %1607 = vmatprep.subr.mxu0 0.0
  %1608 = vmatpush2.msra.mxu0 0.0
  %1609 = vmatprep.subr.mxu0 0.0
  %1610 = vmatpush2.msra.mxu0 0.0
  %1611 = vmatprep.subr.mxu0 0.0
  %1612 = vmatpush2.msra.mxu0 0.0
  %1613 = vmatprep.subr.mxu0 0.0
  %1614 = vmatpush2.msra.mxu0 0.0
  %1615 = vmatprep.subr.mxu0 0.0
  %1616 = vmatpush2.msra.mxu0 0.0
  %1617 = vmatprep.subr.mxu0 0.0
  %1618 = vmatpush2.msra.mxu0 0.0
  %1619 = vmatprep.subr.mxu0 0.0
  %1620 = vmatpush2.msra.mxu0 0.0
  %1621 = vmatprep.subr.mxu0 0.0
  %1622 = vmatpush2.msra.mxu0 0.0
  %1623 = vmatprep.subr.mxu0 0.0
  %1624 = vmatpush2.msra.mxu0 0.0
  %1625 = vmatprep.subr.mxu0 0.0
  %1626 = vmatpush2.msra.mxu0 0.0
  %1627 = vmatprep.mubr.f32.mxu0 0.0
  %1628 = vmatmul.mubr.f32.gmra.mxu0 %v1540
  %v1629 = vpop.f32.mrf.mxu0
  %v1630 = vadd.f32 %v1537, %v1629
  %v1631 = vpop.f32.mrf.mxu0
  %1632 = vmatprep.mubr.f32.mxu0 0.0
  %1633 = vmatmul.mubr.f32.gmra.mxu0 %v1543
  %v1634 = vpop.f32.mrf.mxu0
  %v1635 = vadd.f32 %v1537, %v1634
  %v1636 = vpop.f32.mrf.mxu0
  %1637 = vmatprep.mubr.f32.mxu0 0.0
  %1638 = vmatmul.mubr.f32.gmra.mxu0 %v1546
  %v1639 = vpop.f32.mrf.mxu0
  %v1640 = vadd.f32 %v1537, %v1639
  %v1641 = vpop.f32.mrf.mxu0
  %1642 = vmatprep.mubr.f32.mxu0 0.0
  %1643 = vmatmul.mubr.f32.gmra.mxu0 %v1549
  %v1644 = vpop.f32.mrf.mxu0
  %v1645 = vadd.f32 %v1537, %v1644
  %v1646 = vpop.f32.mrf.mxu0
  %1647 = vmatprep.mubr.f32.mxu0 0.0
  %1648 = vmatmul.mubr.f32.gmra.mxu0 %v1552
  %v1649 = vpop.f32.mrf.mxu0
  %v1650 = vadd.f32 %v1537, %v1649
  %v1651 = vpop.f32.mrf.mxu0
  %1652 = vmatprep.mubr.f32.mxu0 0.0
  %1653 = vmatmul.mubr.f32.gmra.mxu0 %v1555
  %v1654 = vpop.f32.mrf.mxu0
  %v1655 = vadd.f32 %v1537, %v1654
  %v1656 = vpop.f32.mrf.mxu0
  %1657 = vmatprep.mubr.f32.mxu0 0.0
  %1658 = vmatmul.mubr.f32.gmra.mxu0 %v1558
  %v1659 = vpop.f32.mrf.mxu0
  %v1660 = vadd.f32 %v1537, %v1659
  %v1661 = vpop.f32.mrf.mxu0
  %1662 = vmatprep.mubr.f32.mxu0 0.0
  %1663 = vmatmul.mubr.f32.gmra.mxu0 %v1561
  %v1664 = vpop.f32.mrf.mxu0
  %v1665 = vadd.f32 %v1537, %v1664
  %v1666 = vpop.f32.mrf.mxu0
  %1667 = vdwg.mxu0
  %1668 = vmax.xlane.f32.xlu0 %v1630
  %v1669 = vpop.xlane.xlu0 %1668
  %1670 = vmax.xlane.f32.xlu0 %v1635
  %v1671 = vpop.xlane.xlu0 %1670
  %1672 = vmax.xlane.f32.xlu0 %v1640
  %v1673 = vpop.xlane.xlu0 %1672
  %1674 = vmax.xlane.f32.xlu0 %v1645
  %v1675 = vpop.xlane.xlu0 %1674
  %1676 = vmax.xlane.f32.xlu0 %v1650
  %v1677 = vpop.xlane.xlu0 %1676
  %1678 = vmax.xlane.f32.xlu0 %v1655
  %v1679 = vpop.xlane.xlu0 %1678
  %1680 = vmax.xlane.f32.xlu0 %v1660
  %v1681 = vpop.xlane.xlu0 %1680
  %1682 = vmax.xlane.f32.xlu0 %v1665
  %v1683 = vpop.xlane.xlu0 %1682
  %v1684 = vsub.f32 %v1630, %v1669
  %v1685 = vsub.f32 %v1635, %v1671
  %v1686 = vsub.f32 %v1640, %v1673
  %v1687 = vsub.f32 %v1645, %v1675
  %v1688 = vsub.f32 %v1650, %v1677
  %v1689 = vsub.f32 %v1655, %v1679
  %v1690 = vsub.f32 %v1660, %v1681
  %v1691 = vsub.f32 %v1665, %v1683
  %v1692 = vmul.f32 %v1684, 1.442695
  %v1693 = vpow.pop %v1692
  %v1694 = vmul.f32 %v1685, 1.442695
  %v1695 = vpow.pop %v1694
  %v1696 = vmul.f32 %v1686, 1.442695
  %v1697 = vpow.pop %v1696
  %v1698 = vmul.f32 %v1687, 1.442695
  %v1699 = vpow.pop %v1698
  %v1700 = vmul.f32 %v1688, 1.442695
  %v1701 = vpow.pop %v1700
  %v1702 = vmul.f32 %v1689, 1.442695
  %v1703 = vpow.pop %v1702
  %v1704 = vmul.f32 %v1690, 1.442695
  %v1705 = vpow.pop %v1704
  %v1706 = vmul.f32 %v1691, 1.442695
  %v1707 = vpow.pop %v1706
  %1708 = vadd.xlane.f32.xlu0 %v1693
  %v1709 = vpop.xlane.xlu0 %1708
  %1710 = vadd.xlane.f32.xlu0 %v1695
  %v1711 = vpop.xlane.xlu0 %1710
  %1712 = vadd.xlane.f32.xlu0 %v1697
  %v1713 = vpop.xlane.xlu0 %1712
  %1714 = vadd.xlane.f32.xlu0 %v1699
  %v1715 = vpop.xlane.xlu0 %1714
  %1716 = vadd.xlane.f32.xlu0 %v1701
  %v1717 = vpop.xlane.xlu0 %1716
  %1718 = vadd.xlane.f32.xlu0 %v1703
  %v1719 = vpop.xlane.xlu0 %1718
  %1720 = vadd.xlane.f32.xlu0 %v1705
  %v1721 = vpop.xlane.xlu0 %1720
  %1722 = vadd.xlane.f32.xlu0 %v1707
  %v1723 = vpop.xlane.xlu0 %1722
  %v1724 = vlog2.pop %v1709
  %v1725 = vmul.f32 %v1724, 0.6931472
  %v1726 = vlog2.pop %v1711
  %v1727 = vmul.f32 %v1726, 0.6931472
  %v1728 = vlog2.pop %v1713
  %v1729 = vmul.f32 %v1728, 0.6931472
  %v1730 = vlog2.pop %v1715
  %v1731 = vmul.f32 %v1730, 0.6931472
  %v1732 = vlog2.pop %v1717
  %v1733 = vmul.f32 %v1732, 0.6931472
  %v1734 = vlog2.pop %v1719
  %v1735 = vmul.f32 %v1734, 0.6931472
  %v1736 = vlog2.pop %v1721
  %v1737 = vmul.f32 %v1736, 0.6931472
  %v1738 = vlog2.pop %v1723
  %v1739 = vmul.f32 %v1738, 0.6931472
  %v1740 = vadd.f32 %v1725, %v1669
  %v1741 = vadd.f32 %v1727, %v1671
  %v1742 = vadd.f32 %v1729, %v1673
  %v1743 = vadd.f32 %v1731, %v1675
  %v1744 = vadd.f32 %v1733, %v1677
  %v1745 = vadd.f32 %v1735, %v1679
  %v1746 = vadd.f32 %v1737, %v1681
  %v1747 = vadd.f32 %v1739, %v1683
  %v1748 = vsub.f32 %v1630, %v1740
  %v1749 = vsub.f32 %v1635, %v1741
  %v1750 = vsub.f32 %v1640, %v1742
  %v1751 = vsub.f32 %v1645, %v1743
  %v1752 = vsub.f32 %v1650, %v1744
  %v1753 = vsub.f32 %v1655, %v1745
  %v1754 = vsub.f32 %v1660, %v1746
  %v1755 = vsub.f32 %v1665, %v1747
  %1756 = vst [vmem:[%s8] sm:$0xff] %v1748
  %1757 = vst [vmem:[%s8 + $0x8] sm:$0xff] %v1749
  %1758 = vst [vmem:[%s8 + $0x10] sm:$0xff] %v1750
  %1759 = vst [vmem:[%s8 + $0x18] sm:$0xff] %v1751
  %1760 = vst [vmem:[%s8 + $0x20] sm:$0xff] %v1752
  %1761 = vst [vmem:[%s8 + $0x28] sm:$0xff] %v1753
  %1762 = vst [vmem:[%s8 + $0x30] sm:$0xff] %v1754
  %1763 = vst [vmem:[%s8 + $0x38] sm:$0xff] %v1755
  // Predicated region
  $region34: #{tree_model_mdin_forward.1} parent=0 // pred_check
    _
  $region35: #{tree_model_mdin_forward.1} parent=0 // pred_check_branch
    %1765 = sbr.rel (0) target = $region37
  $region36: #{tree_model_mdin_forward.1} parent=0 // pred_region
    _
  $region37: #{tree_model_mdin_forward.1} parent=0 // pred_fallthru
    _
  // Predicated region
  $region38: #{tree_model_mdin_forward.1} parent=0 // pred_check
    _
  $region39: #{tree_model_mdin_forward.1} parent=0 // pred_check_branch
    %1767 = sbr.rel (0) target = $region41
  $region40: #{tree_model_mdin_forward.1} parent=0 // pred_region
    _
  $region41: #{tree_model_mdin_forward.1} parent=0 // pred_fallthru
    _

</llo_original>
